<compile_context>
chip_gen: v6e
topology: v6e:2x2x1
jax: 0.10.0
libtpu: 0.0.40
codegen_flags: <defaults>
</compile_context>

<pallas_src>
import functools

import jax
import jax.numpy as jnp
from jax import lax
from jax.experimental import pallas as pl
from jax.experimental.pallas import tpu as pltpu

# Small self-test sizes (original module: grid_length=5000, hidden_channels=128).
GRID_LENGTH = 256
HIDDEN = 32
K = 7                          # conv kernel size
PAD = K // 2                   # 'same' padding
NEG_SLOPE = 0.1                # LeakyReLU slope
COMPUTE_DTYPE = jnp.bfloat16   # MXU operand / stored-activation dtype (acc is f32)
BODY = 128                     # lane-aligned column where the activation body starts


def _leaky(v):
    return jnp.where(v >= 0, v, NEG_SLOPE * v)


def fused_resnet_kernel(x_ref, w0_ref, b0_ref, wm_ref, bm_ref, wl_ref, bl_ref,
                        o_ref, pad_ref, *, valid_len):
    """All 7 conv+LeakyReLU layers for one sample; activation stays VMEM-resident.

    x_ref:   (1, Lp + 2*PAD) f32  replicate-padded + lane-padded network input
    w0_ref:  (H, K)          f32  conv_in taps (C_in = 1, VPU path)
    b0_ref:  (H, 1)          f32
    wm_ref:  (5*K, H, H)     bf16 middle layers; [j*K + k, o, i] = w_j[o, i, k]
    bm_ref:  (5, H, 1)       f32
    wl_ref:  (K, 8, H)       bf16 conv_out taps; row 0 real, rows 1..7 zero
    bl_ref:  (1, 1)          f32
    o_ref:   (1, Lp)         f32
    pad_ref: VMEM (H, BODY + Lp + PAD) bf16 activation scratch; the body starts at
             the lane-aligned column BODY, replicate halos at [BODY-PAD, BODY) and
             [BODY+valid_len, BODY+Lp+PAD).
    """
    H = b0_ref.shape[0]
    Lp = o_ref.shape[-1]
    n_mid = bm_ref.shape[0]

    def store_padded(y_f32):
        yc = y_f32.astype(pad_ref.dtype)
        # Lane-aligned, lane-dense body store (biggest store of each layer).
        pad_ref[:, BODY:BODY + Lp] = yc
        # Left replicate halo (3 columns).
        pad_ref[:, BODY - PAD:BODY] = jnp.broadcast_to(yc[:, 0:1], (H, PAD))
        # Right halo + lane-padding tail, re-clamped to the TRUE edge value every
        # layer so replicate semantics stay exact even when valid_len < Lp.
        tail = Lp - valid_len + PAD
        pad_ref[:, BODY + valid_len:BODY + Lp + PAD] = jnp.broadcast_to(
            yc[:, valid_len - 1:valid_len], (H, tail))

    # ---- layer 0: Conv1d(1 -> H). Rank-1 contraction -> VPU broadcast-FMA taps. ----
    acc = jnp.broadcast_to(b0_ref[...], (H, Lp)).astype(jnp.float32)  # bias folded in
    for k in range(K):
        acc = acc + w0_ref[:, k:k + 1] * x_ref[:, k:k + Lp]           # (H,1)*(1,Lp)
    store_padded(_leaky(acc))

    # ---- layers 1..5: Conv1d(H -> H) as K accumulated per-tap MXU dots (no im2col). --
    def mid_layer(j, carry):
        acc = jnp.zeros((H, Lp), jnp.float32)
        for k in range(K):                      # short fixed loop: keep it unrolled
            w_k = wm_ref[j * K + k]             # (H, H) bf16, dynamic layer index
            rhs = pad_ref[:, BODY - PAD + k:BODY - PAD + k + Lp]
            acc = acc + jnp.dot(w_k, rhs, preferred_element_type=jnp.float32)
        store_padded(_leaky(acc + bm_ref[j]))
        return carry

    lax.fori_loop(0, n_mid, mid_layer, 0)

    # ---- layer 6: Conv1d(H -> 1); per-tap dots with 8-row zero-padded weights. ----
    acc = jnp.zeros((8, Lp), jnp.float32)
    for k in range(K):
        rhs = pad_ref[:, BODY - PAD + k:BODY - PAD + k + Lp]
        acc = acc + jnp.dot(wl_ref[k], rhs, preferred_element_type=jnp.float32)
    # The reference Net applies LeakyReLU after conv_out as well.
    o_ref[...] = _leaky(acc[0:1, :] + bl_ref[...])


def fused_resnet(x, params):
    """x: (N, 1, L) f32; params: 7 tuples (w, b) in PyTorch Conv1d layout.

    Returns leaky(conv_out(...leaky(conv_in(x))...)) with exact 'same'/replicate
    padding semantics, shape (N, 1, L), f32.
    """
    N, c_in, L = x.shape
    assert c_in == 1
    H = params[1][0].shape[0]
    Lp = ((L + 127) // 128) * 128          # lane-padded working length
    Lp_in = Lp + 2 * PAD

    # Replicate ('edge') padding of the input + lane padding on the right.
    x_pad = jnp.pad(x.astype(jnp.float32),
                    ((0, 0), (0, 0), (PAD, PAD + Lp - L)), mode="edge")

    # Layer 0: (H, 1, K) -> (H, K) f32 (VPU broadcast-FMA path).
    w0, b0 = params[0]
    w0_mat = w0[:, 0, :].astype(jnp.float32)
    b0_col = b0.reshape(H, 1).astype(jnp.float32)

    # Layers 1..5: (H, H, K) -> per-tap (H, H) matrices, flat index [j*K + k, o, i].
    wm = jnp.concatenate(
        [jnp.transpose(w, (2, 0, 1)) for (w, _) in params[1:6]], axis=0
    ).astype(COMPUTE_DTYPE)                                   # (5*K, H, H)
    bm = jnp.stack([b.reshape(H, 1) for (_, b) in params[1:6]]
                   ).astype(jnp.float32)                      # (5, H, 1)

    # Layer 6: (1, H, K) -> (K, 8, H); row 0 real, rows 1..7 zero (MXU-friendly).
    w6, b6 = params[6]
    w6_taps = jnp.transpose(w6, (2, 0, 1))                    # (K, 1, H)
    wl = jnp.concatenate(
        [w6_taps, jnp.zeros((K, 7, H), w6_taps.dtype)], axis=1
    ).astype(COMPUTE_DTYPE)                                   # (K, 8, H)
    bl = b6.reshape(1, 1).astype(jnp.float32)

    n_mid = bm.shape[0]
    kern = functools.partial(fused_resnet_kernel, valid_len=L)
    single = pl.Buffered(1)    # constant index_maps -> one DMA, single-buffer them

    out = pl.pallas_call(
        kern,
        out_shape=jax.ShapeDtypeStruct((N, 1, Lp), jnp.float32),
        grid=(N,),
        in_specs=[
            pl.BlockSpec((None, 1, Lp_in), lambda n: (n, 0, 0)),          # per-sample x
            pl.BlockSpec((H, K), lambda n: (0, 0), pipeline_mode=single),
            pl.BlockSpec((H, 1), lambda n: (0, 0), pipeline_mode=single),
            pl.BlockSpec((n_mid * K, H, H), lambda n: (0, 0, 0),
                         pipeline_mode=single),
            pl.BlockSpec((n_mid, H, 1), lambda n: (0, 0, 0),
                         pipeline_mode=single),
            pl.BlockSpec((K, 8, H), lambda n: (0, 0, 0), pipeline_mode=single),
            pl.BlockSpec((1, 1), lambda n: (0, 0), pipeline_mode=single),
        ],
        out_specs=pl.BlockSpec((None, 1, Lp), lambda n: (n, 0, 0)),
        scratch_shapes=[
            pltpu.VMEM((H, BODY + Lp + PAD), COMPUTE_DTYPE),  # padded activation
        ],
        compiler_params=pltpu.CompilerParams(
            dimension_semantics=("parallel",),
            # ~4 MiB footprint at the real H=128/L=5120 config; 24 MiB keeps margin
            # without starving the compiler's internal scratch (64 MiB/TC on v7x).
            vmem_limit_bytes=24 * 1024 * 1024,
        ),
    )(x_pad, w0_mat, b0_col, wm, bm, wl, bl)
    return out[:, :, :L]       # drop the lane-padding tail


def net_forward(x, params):
    """Matches Net.forward: one fused resnet launch over the [x ; ones] batch."""
    N = x.shape[0]
    L = x.shape[-1]
    ones_vec = jnp.ones((1, 1, L), jnp.float32)
    batched = jnp.concatenate([x, ones_vec], axis=0)      # (N+1, 1, L)
    res = fused_resnet(batched, params)
    x_nn = x + res[:N]
    consistency = ones_vec + res[N:]
    constant = jnp.sum(consistency) / L
    return x_nn / constant


# ----------------------------- pure-JAX f32 reference ----------------------------- #

def _conv1d_same_replicate(x, w, b):
    """PyTorch Conv1d(padding='same', padding_mode='replicate') in f32."""
    L = x.shape[-1]
    xp = jnp.pad(x, ((0, 0), (0, 0), (PAD, PAD)), mode="edge")
    y = b[None, :, None]
    for k in range(K):
        y = y + jnp.einsum("oi,nil->nol", w[:, :, k], xp[:, :, k:k + L],
                           precision="highest")
    return y


def net_forward_ref(x, params):
    def resnet(v):
        for (w, b) in params:
            v = _leaky(_conv1d_same_replicate(v, w, b))
        return v
    L = x.shape[-1]
    ones_vec = jnp.ones((1, 1, L), jnp.float32)
    x_nn = x + resnet(x)
    consistency = ones_vec + resnet(ones_vec)
    constant = jnp.sum(consistency) / L
    return x_nn / constant


def init_params(hidden, key):
    """Deterministic synthetic params, PyTorch Conv1d-style uniform init."""
    dims = [(1, hidden)] + [(hidden, hidden)] * 5 + [(hidden, 1)]
    params = []
    for (cin, cout) in dims:
        key, kw, kb = jax.random.split(key, 3)
        bound = 1.0 / float(jnp.sqrt(jnp.float32(cin * K)))
        w = jax.random.uniform(kw, (cout, cin, K), jnp.float32, -bound, bound)
        b = jax.random.uniform(kb, (cout,), jnp.float32, -bound, bound)
        params.append((w, b))
    return params


if __name__ == "__main__":
    key = jax.random.PRNGKey(0)
    key_x, key_p = jax.random.split(key)
    # input: (batch=2, channels=1, length=GRID_LENGTH), NCL like PyTorch Conv1d
    x = jax.random.normal(key_x, (2, 1, GRID_LENGTH), jnp.float32)
    params = init_params(HIDDEN, key_p)

    fwd = jax.jit(net_forward)
    out = jax.block_until_ready(fwd(x, params))
    assert out.shape == (2, 1, GRID_LENGTH)
    assert bool(jnp.all(jnp.isfinite(out)))

    # Explicit tolerance check vs. a pure-f32 JAX reference (review concern: bf16
    # weights / inter-layer activations inside the kernel).
    ref = net_forward_ref(x, params)
    max_err = float(jnp.max(jnp.abs(out - ref)))
    assert max_err < 1e-2, f"kernel vs f32 reference max|err|={max_err}"
    print("KERNEL_OK")
</pallas_src>

<mosaic_0001>
module attributes {stable_mosaic.version = 11 : i64} {
  func.func @fused_resnet_kernel(%arg0: i32, %arg1: memref<1x1x262xf32, #tpu.memory_space<vmem>>, %arg2: memref<32x7xf32, #tpu.memory_space<vmem>>, %arg3: memref<32x1xf32, #tpu.memory_space<vmem>>, %arg4: memref<35x32x32xbf16, #tpu.memory_space<vmem>>, %arg5: memref<5x32x1xf32, #tpu.memory_space<vmem>>, %arg6: memref<7x8x32xbf16, #tpu.memory_space<vmem>>, %arg7: memref<1x1xf32, #tpu.memory_space<vmem>>, %arg8: memref<1x1x256xf32, #tpu.memory_space<vmem>>, %arg9: memref<32x387xbf16, #tpu.memory_space<vmem>>) attributes {dimension_semantics = [#tpu.dimension_semantics<parallel>], iteration_bounds = array<i64: 3>, scalar_prefetch = 0 : i64, scratch_operands = 1 : i64, tpu.core_type = #tpu.core_type<tc>, window_params = [{transform_indices = @transform_0, window_bounds = array<i64: 1, 1, 262>}, {pipeline_mode = #tpu.pipeline_mode<synchronous>, transform_indices = @transform_1, window_bounds = array<i64: 32, 7>}, {pipeline_mode = #tpu.pipeline_mode<synchronous>, transform_indices = @transform_2, window_bounds = array<i64: 32, 1>}, {pipeline_mode = #tpu.pipeline_mode<synchronous>, transform_indices = @transform_3, window_bounds = array<i64: 35, 32, 32>}, {pipeline_mode = #tpu.pipeline_mode<synchronous>, transform_indices = @transform_4, window_bounds = array<i64: 5, 32, 1>}, {pipeline_mode = #tpu.pipeline_mode<synchronous>, transform_indices = @transform_5, window_bounds = array<i64: 7, 8, 32>}, {pipeline_mode = #tpu.pipeline_mode<synchronous>, transform_indices = @transform_6, window_bounds = array<i64: 1, 1>}, {transform_indices = @transform_7, window_bounds = array<i64: 1, 1, 256>}]} {
    %c0 = arith.constant 0 : index
    %c0_0 = arith.constant 0 : index
    %0 = vector.load %arg3[%c0, %c0_0] : memref<32x1xf32, #tpu.memory_space<vmem>>, vector<32x1xf32>
    %1 = vector.shape_cast %0 : vector<32x1xf32> to vector<32x1xf32>
    %2 = vector.broadcast %1 : vector<32x1xf32> to vector<32x256xf32>
    %c0_1 = arith.constant 0 : index
    %c0_2 = arith.constant 0 : index
    %3 = vector.load %arg2[%c0_1, %c0_2] : memref<32x7xf32, #tpu.memory_space<vmem>>, vector<32x1xf32>
    %c0_3 = arith.constant 0 : index
    %c0_4 = arith.constant 0 : index
    %c0_5 = arith.constant 0 : index
    %4 = vector.load %arg1[%c0_3, %c0_4, %c0_5] : memref<1x1x262xf32, #tpu.memory_space<vmem>>, vector<1x1x256xf32>
    %5 = vector.shape_cast %4 : vector<1x1x256xf32> to vector<1x256xf32>
    %6 = vector.broadcast %3 : vector<32x1xf32> to vector<32x256xf32>
    %7 = vector.broadcast %5 : vector<1x256xf32> to vector<32x256xf32>
    %8 = arith.mulf %6, %7 : vector<32x256xf32>
    %9 = arith.addf %2, %8 : vector<32x256xf32>
    %c0_6 = arith.constant 0 : index
    %c1 = arith.constant 1 : index
    %10 = vector.load %arg2[%c0_6, %c1] : memref<32x7xf32, #tpu.memory_space<vmem>>, vector<32x1xf32>
    %c0_7 = arith.constant 0 : index
    %c0_8 = arith.constant 0 : index
    %c1_9 = arith.constant 1 : index
    %11 = vector.load %arg1[%c0_7, %c0_8, %c1_9] : memref<1x1x262xf32, #tpu.memory_space<vmem>>, vector<1x1x256xf32>
    %12 = vector.shape_cast %11 : vector<1x1x256xf32> to vector<1x256xf32>
    %13 = vector.broadcast %10 : vector<32x1xf32> to vector<32x256xf32>
    %14 = vector.broadcast %12 : vector<1x256xf32> to vector<32x256xf32>
    %15 = arith.mulf %13, %14 : vector<32x256xf32>
    %16 = arith.addf %9, %15 : vector<32x256xf32>
    %c0_10 = arith.constant 0 : index
    %c2 = arith.constant 2 : index
    %17 = vector.load %arg2[%c0_10, %c2] : memref<32x7xf32, #tpu.memory_space<vmem>>, vector<32x1xf32>
    %c0_11 = arith.constant 0 : index
    %c0_12 = arith.constant 0 : index
    %c2_13 = arith.constant 2 : index
    %18 = vector.load %arg1[%c0_11, %c0_12, %c2_13] : memref<1x1x262xf32, #tpu.memory_space<vmem>>, vector<1x1x256xf32>
    %19 = vector.shape_cast %18 : vector<1x1x256xf32> to vector<1x256xf32>
    %20 = vector.broadcast %17 : vector<32x1xf32> to vector<32x256xf32>
    %21 = vector.broadcast %19 : vector<1x256xf32> to vector<32x256xf32>
    %22 = arith.mulf %20, %21 : vector<32x256xf32>
    %23 = arith.addf %16, %22 : vector<32x256xf32>
    %c0_14 = arith.constant 0 : index
    %c3 = arith.constant 3 : index
    %24 = vector.load %arg2[%c0_14, %c3] : memref<32x7xf32, #tpu.memory_space<vmem>>, vector<32x1xf32>
    %c0_15 = arith.constant 0 : index
    %c0_16 = arith.constant 0 : index
    %c3_17 = arith.constant 3 : index
    %25 = vector.load %arg1[%c0_15, %c0_16, %c3_17] : memref<1x1x262xf32, #tpu.memory_space<vmem>>, vector<1x1x256xf32>
    %26 = vector.shape_cast %25 : vector<1x1x256xf32> to vector<1x256xf32>
    %27 = vector.broadcast %24 : vector<32x1xf32> to vector<32x256xf32>
    %28 = vector.broadcast %26 : vector<1x256xf32> to vector<32x256xf32>
    %29 = arith.mulf %27, %28 : vector<32x256xf32>
    %30 = arith.addf %23, %29 : vector<32x256xf32>
    %c0_18 = arith.constant 0 : index
    %c4 = arith.constant 4 : index
    %31 = vector.load %arg2[%c0_18, %c4] : memref<32x7xf32, #tpu.memory_space<vmem>>, vector<32x1xf32>
    %c0_19 = arith.constant 0 : index
    %c0_20 = arith.constant 0 : index
    %c4_21 = arith.constant 4 : index
    %32 = vector.load %arg1[%c0_19, %c0_20, %c4_21] : memref<1x1x262xf32, #tpu.memory_space<vmem>>, vector<1x1x256xf32>
    %33 = vector.shape_cast %32 : vector<1x1x256xf32> to vector<1x256xf32>
    %34 = vector.broadcast %31 : vector<32x1xf32> to vector<32x256xf32>
    %35 = vector.broadcast %33 : vector<1x256xf32> to vector<32x256xf32>
    %36 = arith.mulf %34, %35 : vector<32x256xf32>
    %37 = arith.addf %30, %36 : vector<32x256xf32>
    %c0_22 = arith.constant 0 : index
    %c5 = arith.constant 5 : index
    %38 = vector.load %arg2[%c0_22, %c5] : memref<32x7xf32, #tpu.memory_space<vmem>>, vector<32x1xf32>
    %c0_23 = arith.constant 0 : index
    %c0_24 = arith.constant 0 : index
    %c5_25 = arith.constant 5 : index
    %39 = vector.load %arg1[%c0_23, %c0_24, %c5_25] : memref<1x1x262xf32, #tpu.memory_space<vmem>>, vector<1x1x256xf32>
    %40 = vector.shape_cast %39 : vector<1x1x256xf32> to vector<1x256xf32>
    %41 = vector.broadcast %38 : vector<32x1xf32> to vector<32x256xf32>
    %42 = vector.broadcast %40 : vector<1x256xf32> to vector<32x256xf32>
    %43 = arith.mulf %41, %42 : vector<32x256xf32>
    %44 = arith.addf %37, %43 : vector<32x256xf32>
    %c0_26 = arith.constant 0 : index
    %c6 = arith.constant 6 : index
    %45 = vector.load %arg2[%c0_26, %c6] : memref<32x7xf32, #tpu.memory_space<vmem>>, vector<32x1xf32>
    %c0_27 = arith.constant 0 : index
    %c0_28 = arith.constant 0 : index
    %c6_29 = arith.constant 6 : index
    %46 = vector.load %arg1[%c0_27, %c0_28, %c6_29] : memref<1x1x262xf32, #tpu.memory_space<vmem>>, vector<1x1x256xf32>
    %47 = vector.shape_cast %46 : vector<1x1x256xf32> to vector<1x256xf32>
    %48 = vector.broadcast %45 : vector<32x1xf32> to vector<32x256xf32>
    %49 = vector.broadcast %47 : vector<1x256xf32> to vector<32x256xf32>
    %50 = arith.mulf %48, %49 : vector<32x256xf32>
    %51 = arith.addf %44, %50 : vector<32x256xf32>
    %cst = arith.constant 0.000000e+00 : f32
    %52 = vector.broadcast %cst : f32 to vector<32x256xf32>
    %53 = arith.cmpf oge, %51, %52 : vector<32x256xf32>
    %cst_30 = arith.constant 1.000000e-01 : f32
    %54 = vector.broadcast %cst_30 : f32 to vector<32x256xf32>
    %55 = arith.mulf %54, %51 : vector<32x256xf32>
    %56 = arith.select %53, %51, %55 : vector<32x256xi1>, vector<32x256xf32>
    %57 = arith.truncf %56 : vector<32x256xf32> to vector<32x256xbf16>
    %c0_31 = arith.constant 0 : index
    %c128 = arith.constant 128 : index
    %58 = vector.load %arg9[%c0_31, %c128] : memref<32x387xbf16, #tpu.memory_space<vmem>>, vector<32x256xbf16>
    tpu.vector_store %arg9[%c0_31, %c128], %57 {strides = array<i32>} : memref<32x387xbf16, #tpu.memory_space<vmem>>, vector<32x256xbf16>,
    %59 = vector.extract_strided_slice %57 {offsets = [0, 0], sizes = [32, 1], strides = [1, 1]} : vector<32x256xbf16> to vector<32x1xbf16>
    %60 = vector.shape_cast %59 : vector<32x1xbf16> to vector<32x1xbf16>
    %61 = vector.broadcast %60 : vector<32x1xbf16> to vector<32x3xbf16>
    %c0_32 = arith.constant 0 : index
    %c125 = arith.constant 125 : index
    %62 = vector.load %arg9[%c0_32, %c125] : memref<32x387xbf16, #tpu.memory_space<vmem>>, vector<32x3xbf16>
    tpu.vector_store %arg9[%c0_32, %c125], %61 {strides = array<i32>} : memref<32x387xbf16, #tpu.memory_space<vmem>>, vector<32x3xbf16>,
    %63 = vector.extract_strided_slice %57 {offsets = [0, 255], sizes = [32, 1], strides = [1, 1]} : vector<32x256xbf16> to vector<32x1xbf16>
    %64 = vector.shape_cast %63 : vector<32x1xbf16> to vector<32x1xbf16>
    %65 = vector.broadcast %64 : vector<32x1xbf16> to vector<32x3xbf16>
    %c0_33 = arith.constant 0 : index
    %c384 = arith.constant 384 : index
    %66 = vector.load %arg9[%c0_33, %c384] : memref<32x387xbf16, #tpu.memory_space<vmem>>, vector<32x3xbf16>
    tpu.vector_store %arg9[%c0_33, %c384], %65 {strides = array<i32>} : memref<32x387xbf16, #tpu.memory_space<vmem>>, vector<32x3xbf16>,
    %c0_i32 = arith.constant 0 : i32
    %c5_i32 = arith.constant 5 : i32
    %67 = arith.addi %c0_i32, %c5_i32 : i32
    %c1_i32 = arith.constant 1 : i32
    scf.for %arg10 = %c0_i32 to %67 step %c1_i32  : i32 {
      %cst_80 = arith.constant 0.000000e+00 : f32
      %116 = vector.broadcast %cst_80 : f32 to vector<32x256xf32>
      %c7_i32 = arith.constant 7 : i32
      %117 = arith.muli %arg10, %c7_i32 : i32
      %c0_i32_81 = arith.constant 0 : i32
      %118 = arith.addi %117, %c0_i32_81 : i32
      %119 = arith.index_cast %118 : i32 to index
      %c0_82 = arith.constant 0 : index
      %c0_83 = arith.constant 0 : index
      %120 = vector.load %arg4[%119, %c0_82, %c0_83] : memref<35x32x32xbf16, #tpu.memory_space<vmem>>, vector<1x32x32xbf16>
      %121 = vector.shape_cast %120 : vector<1x32x32xbf16> to vector<32x32xbf16>
      %c0_84 = arith.constant 0 : index
      %c125_85 = arith.constant 125 : index
      %122 = vector.load %arg9[%c0_84, %c125_85] : memref<32x387xbf16, #tpu.memory_space<vmem>>, vector<32x256xbf16>
      %cst_86 = arith.constant dense<0.000000e+00> : vector<32x256xf32>
      %123 = tpu.matmul %121, %122, %cst_86 {dimension_numbers = #tpu.dot_dimension_numbers<[1], [0], [0], [1], [0, 0, 1, 1], [], []>} : vector<32x32xbf16>, vector<32x256xbf16>, vector<32x256xf32> -> vector<32x256xf32>
      %124 = arith.addf %116, %123 : vector<32x256xf32>
      %c7_i32_87 = arith.constant 7 : i32
      %125 = arith.muli %arg10, %c7_i32_87 : i32
      %c1_i32_88 = arith.constant 1 : i32
      %126 = arith.addi %125, %c1_i32_88 : i32
      %127 = arith.index_cast %126 : i32 to index
      %c0_89 = arith.constant 0 : index
      %c0_90 = arith.constant 0 : index
      %128 = vector.load %arg4[%127, %c0_89, %c0_90] : memref<35x32x32xbf16, #tpu.memory_space<vmem>>, vector<1x32x32xbf16>
      %129 = vector.shape_cast %128 : vector<1x32x32xbf16> to vector<32x32xbf16>
      %c0_91 = arith.constant 0 : index
      %c126_92 = arith.constant 126 : index
      %130 = vector.load %arg9[%c0_91, %c126_92] : memref<32x387xbf16, #tpu.memory_space<vmem>>, vector<32x256xbf16>
      %cst_93 = arith.constant dense<0.000000e+00> : vector<32x256xf32>
      %131 = tpu.matmul %129, %130, %cst_93 {dimension_numbers = #tpu.dot_dimension_numbers<[1], [0], [0], [1], [0, 0, 1, 1], [], []>} : vector<32x32xbf16>, vector<32x256xbf16>, vector<32x256xf32> -> vector<32x256xf32>
      %132 = arith.addf %124, %131 : vector<32x256xf32>
      %c7_i32_94 = arith.constant 7 : i32
      %133 = arith.muli %arg10, %c7_i32_94 : i32
      %c2_i32 = arith.constant 2 : i32
      %134 = arith.addi %133, %c2_i32 : i32
      %135 = arith.index_cast %134 : i32 to index
      %c0_95 = arith.constant 0 : index
      %c0_96 = arith.constant 0 : index
      %136 = vector.load %arg4[%135, %c0_95, %c0_96] : memref<35x32x32xbf16, #tpu.memory_space<vmem>>, vector<1x32x32xbf16>
      %137 = vector.shape_cast %136 : vector<1x32x32xbf16> to vector<32x32xbf16>
      %c0_97 = arith.constant 0 : index
      %c127_98 = arith.constant 127 : index
      %138 = vector.load %arg9[%c0_97, %c127_98] : memref<32x387xbf16, #tpu.memory_space<vmem>>, vector<32x256xbf16>
      %cst_99 = arith.constant dense<0.000000e+00> : vector<32x256xf32>
      %139 = tpu.matmul %137, %138, %cst_99 {dimension_numbers = #tpu.dot_dimension_numbers<[1], [0], [0], [1], [0, 0, 1, 1], [], []>} : vector<32x32xbf16>, vector<32x256xbf16>, vector<32x256xf32> -> vector<32x256xf32>
      %140 = arith.addf %132, %139 : vector<32x256xf32>
      %c7_i32_100 = arith.constant 7 : i32
      %141 = arith.muli %arg10, %c7_i32_100 : i32
      %c3_i32 = arith.constant 3 : i32
      %142 = arith.addi %141, %c3_i32 : i32
      %143 = arith.index_cast %142 : i32 to index
      %c0_101 = arith.constant 0 : index
      %c0_102 = arith.constant 0 : index
      %144 = vector.load %arg4[%143, %c0_101, %c0_102] : memref<35x32x32xbf16, #tpu.memory_space<vmem>>, vector<1x32x32xbf16>
      %145 = vector.shape_cast %144 : vector<1x32x32xbf16> to vector<32x32xbf16>
      %c0_103 = arith.constant 0 : index
      %c128_104 = arith.constant 128 : index
      %146 = vector.load %arg9[%c0_103, %c128_104] : memref<32x387xbf16, #tpu.memory_space<vmem>>, vector<32x256xbf16>
      %cst_105 = arith.constant dense<0.000000e+00> : vector<32x256xf32>
      %147 = tpu.matmul %145, %146, %cst_105 {dimension_numbers = #tpu.dot_dimension_numbers<[1], [0], [0], [1], [0, 0, 1, 1], [], []>} : vector<32x32xbf16>, vector<32x256xbf16>, vector<32x256xf32> -> vector<32x256xf32>
      %148 = arith.addf %140, %147 : vector<32x256xf32>
      %c7_i32_106 = arith.constant 7 : i32
      %149 = arith.muli %arg10, %c7_i32_106 : i32
      %c4_i32 = arith.constant 4 : i32
      %150 = arith.addi %149, %c4_i32 : i32
      %151 = arith.index_cast %150 : i32 to index
      %c0_107 = arith.constant 0 : index
      %c0_108 = arith.constant 0 : index
      %152 = vector.load %arg4[%151, %c0_107, %c0_108] : memref<35x32x32xbf16, #tpu.memory_space<vmem>>, vector<1x32x32xbf16>
      %153 = vector.shape_cast %152 : vector<1x32x32xbf16> to vector<32x32xbf16>
      %c0_109 = arith.constant 0 : index
      %c129_110 = arith.constant 129 : index
      %154 = vector.load %arg9[%c0_109, %c129_110] : memref<32x387xbf16, #tpu.memory_space<vmem>>, vector<32x256xbf16>
      %cst_111 = arith.constant dense<0.000000e+00> : vector<32x256xf32>
      %155 = tpu.matmul %153, %154, %cst_111 {dimension_numbers = #tpu.dot_dimension_numbers<[1], [0], [0], [1], [0, 0, 1, 1], [], []>} : vector<32x32xbf16>, vector<32x256xbf16>, vector<32x256xf32> -> vector<32x256xf32>
      %156 = arith.addf %148, %155 : vector<32x256xf32>
      %c7_i32_112 = arith.constant 7 : i32
      %157 = arith.muli %arg10, %c7_i32_112 : i32
      %c5_i32_113 = arith.constant 5 : i32
      %158 = arith.addi %157, %c5_i32_113 : i32
      %159 = arith.index_cast %158 : i32 to index
      %c0_114 = arith.constant 0 : index
      %c0_115 = arith.constant 0 : index
      %160 = vector.load %arg4[%159, %c0_114, %c0_115] : memref<35x32x32xbf16, #tpu.memory_space<vmem>>, vector<1x32x32xbf16>
      %161 = vector.shape_cast %160 : vector<1x32x32xbf16> to vector<32x32xbf16>
      %c0_116 = arith.constant 0 : index
      %c130_117 = arith.constant 130 : index
      %162 = vector.load %arg9[%c0_116, %c130_117] : memref<32x387xbf16, #tpu.memory_space<vmem>>, vector<32x256xbf16>
      %cst_118 = arith.constant dense<0.000000e+00> : vector<32x256xf32>
      %163 = tpu.matmul %161, %162, %cst_118 {dimension_numbers = #tpu.dot_dimension_numbers<[1], [0], [0], [1], [0, 0, 1, 1], [], []>} : vector<32x32xbf16>, vector<32x256xbf16>, vector<32x256xf32> -> vector<32x256xf32>
      %164 = arith.addf %156, %163 : vector<32x256xf32>
      %c7_i32_119 = arith.constant 7 : i32
      %165 = arith.muli %arg10, %c7_i32_119 : i32
      %c6_i32 = arith.constant 6 : i32
      %166 = arith.addi %165, %c6_i32 : i32
      %167 = arith.index_cast %166 : i32 to index
      %c0_120 = arith.constant 0 : index
      %c0_121 = arith.constant 0 : index
      %168 = vector.load %arg4[%167, %c0_120, %c0_121] : memref<35x32x32xbf16, #tpu.memory_space<vmem>>, vector<1x32x32xbf16>
      %169 = vector.shape_cast %168 : vector<1x32x32xbf16> to vector<32x32xbf16>
      %c0_122 = arith.constant 0 : index
      %c131_123 = arith.constant 131 : index
      %170 = vector.load %arg9[%c0_122, %c131_123] : memref<32x387xbf16, #tpu.memory_space<vmem>>, vector<32x256xbf16>
      %cst_124 = arith.constant dense<0.000000e+00> : vector<32x256xf32>
      %171 = tpu.matmul %169, %170, %cst_124 {dimension_numbers = #tpu.dot_dimension_numbers<[1], [0], [0], [1], [0, 0, 1, 1], [], []>} : vector<32x32xbf16>, vector<32x256xbf16>, vector<32x256xf32> -> vector<32x256xf32>
      %172 = arith.addf %164, %171 : vector<32x256xf32>
      %173 = arith.index_cast %arg10 : i32 to index
      %c0_125 = arith.constant 0 : index
      %c0_126 = arith.constant 0 : index
      %174 = vector.load %arg5[%173, %c0_125, %c0_126] : memref<5x32x1xf32, #tpu.memory_space<vmem>>, vector<1x32x1xf32>
      %175 = vector.shape_cast %174 : vector<1x32x1xf32> to vector<32x1xf32>
      %176 = vector.broadcast %175 : vector<32x1xf32> to vector<32x256xf32>
      %177 = arith.addf %172, %176 : vector<32x256xf32>
      %cst_127 = arith.constant 0.000000e+00 : f32
      %178 = vector.broadcast %cst_127 : f32 to vector<32x256xf32>
      %179 = arith.cmpf oge, %177, %178 : vector<32x256xf32>
      %cst_128 = arith.constant 1.000000e-01 : f32
      %180 = vector.broadcast %cst_128 : f32 to vector<32x256xf32>
      %181 = arith.mulf %180, %177 : vector<32x256xf32>
      %182 = arith.select %179, %177, %181 : vector<32x256xi1>, vector<32x256xf32>
      %183 = arith.truncf %182 : vector<32x256xf32> to vector<32x256xbf16>
      %c0_129 = arith.constant 0 : index
      %c128_130 = arith.constant 128 : index
      %184 = vector.load %arg9[%c0_129, %c128_130] : memref<32x387xbf16, #tpu.memory_space<vmem>>, vector<32x256xbf16>
      tpu.vector_store %arg9[%c0_129, %c128_130], %183 {strides = array<i32>} : memref<32x387xbf16, #tpu.memory_space<vmem>>, vector<32x256xbf16>,
      %185 = vector.extract_strided_slice %183 {offsets = [0, 0], sizes = [32, 1], strides = [1, 1]} : vector<32x256xbf16> to vector<32x1xbf16>
      %186 = vector.shape_cast %185 : vector<32x1xbf16> to vector<32x1xbf16>
      %187 = vector.broadcast %186 : vector<32x1xbf16> to vector<32x3xbf16>
      %c0_131 = arith.constant 0 : index
      %c125_132 = arith.constant 125 : index
      %188 = vector.load %arg9[%c0_131, %c125_132] : memref<32x387xbf16, #tpu.memory_space<vmem>>, vector<32x3xbf16>
      tpu.vector_store %arg9[%c0_131, %c125_132], %187 {strides = array<i32>} : memref<32x387xbf16, #tpu.memory_space<vmem>>, vector<32x3xbf16>,
      %189 = vector.extract_strided_slice %183 {offsets = [0, 255], sizes = [32, 1], strides = [1, 1]} : vector<32x256xbf16> to vector<32x1xbf16>
      %190 = vector.shape_cast %189 : vector<32x1xbf16> to vector<32x1xbf16>
      %191 = vector.broadcast %190 : vector<32x1xbf16> to vector<32x3xbf16>
      %c0_133 = arith.constant 0 : index
      %c384_134 = arith.constant 384 : index
      %192 = vector.load %arg9[%c0_133, %c384_134] : memref<32x387xbf16, #tpu.memory_space<vmem>>, vector<32x3xbf16>
      tpu.vector_store %arg9[%c0_133, %c384_134], %191 {strides = array<i32>} : memref<32x387xbf16, #tpu.memory_space<vmem>>, vector<32x3xbf16>,
    }
    %c5_i32_34 = arith.constant 5 : i32
    %cst_35 = arith.constant 0.000000e+00 : f32
    %68 = vector.broadcast %cst_35 : f32 to vector<8x256xf32>
    %c0_36 = arith.constant 0 : index
    %c125_37 = arith.constant 125 : index
    %69 = vector.load %arg9[%c0_36, %c125_37] : memref<32x387xbf16, #tpu.memory_space<vmem>>, vector<32x256xbf16>
    %c0_38 = arith.constant 0 : index
    %c0_39 = arith.constant 0 : index
    %c0_40 = arith.constant 0 : index
    %70 = vector.load %arg6[%c0_38, %c0_39, %c0_40] : memref<7x8x32xbf16, #tpu.memory_space<vmem>>, vector<1x8x32xbf16>
    %71 = vector.shape_cast %70 : vector<1x8x32xbf16> to vector<8x32xbf16>
    %cst_41 = arith.constant dense<0.000000e+00> : vector<8x256xf32>
    %72 = tpu.matmul %71, %69, %cst_41 {dimension_numbers = #tpu.dot_dimension_numbers<[1], [0], [0], [1], [0, 0, 1, 1], [], []>} : vector<8x32xbf16>, vector<32x256xbf16>, vector<8x256xf32> -> vector<8x256xf32>
    %73 = arith.addf %68, %72 : vector<8x256xf32>
    %c0_42 = arith.constant 0 : index
    %c126 = arith.constant 126 : index
    %74 = vector.load %arg9[%c0_42, %c126] : memref<32x387xbf16, #tpu.memory_space<vmem>>, vector<32x256xbf16>
    %c1_43 = arith.constant 1 : index
    %c0_44 = arith.constant 0 : index
    %c0_45 = arith.constant 0 : index
    %75 = vector.load %arg6[%c1_43, %c0_44, %c0_45] : memref<7x8x32xbf16, #tpu.memory_space<vmem>>, vector<1x8x32xbf16>
    %76 = vector.shape_cast %75 : vector<1x8x32xbf16> to vector<8x32xbf16>
    %cst_46 = arith.constant dense<0.000000e+00> : vector<8x256xf32>
    %77 = tpu.matmul %76, %74, %cst_46 {dimension_numbers = #tpu.dot_dimension_numbers<[1], [0], [0], [1], [0, 0, 1, 1], [], []>} : vector<8x32xbf16>, vector<32x256xbf16>, vector<8x256xf32> -> vector<8x256xf32>
    %78 = arith.addf %73, %77 : vector<8x256xf32>
    %c0_47 = arith.constant 0 : index
    %c127 = arith.constant 127 : index
    %79 = vector.load %arg9[%c0_47, %c127] : memref<32x387xbf16, #tpu.memory_space<vmem>>, vector<32x256xbf16>
    %c2_48 = arith.constant 2 : index
    %c0_49 = arith.constant 0 : index
    %c0_50 = arith.constant 0 : index
    %80 = vector.load %arg6[%c2_48, %c0_49, %c0_50] : memref<7x8x32xbf16, #tpu.memory_space<vmem>>, vector<1x8x32xbf16>
    %81 = vector.shape_cast %80 : vector<1x8x32xbf16> to vector<8x32xbf16>
    %cst_51 = arith.constant dense<0.000000e+00> : vector<8x256xf32>
    %82 = tpu.matmul %81, %79, %cst_51 {dimension_numbers = #tpu.dot_dimension_numbers<[1], [0], [0], [1], [0, 0, 1, 1], [], []>} : vector<8x32xbf16>, vector<32x256xbf16>, vector<8x256xf32> -> vector<8x256xf32>
    %83 = arith.addf %78, %82 : vector<8x256xf32>
    %c0_52 = arith.constant 0 : index
    %c128_53 = arith.constant 128 : index
    %84 = vector.load %arg9[%c0_52, %c128_53] : memref<32x387xbf16, #tpu.memory_space<vmem>>, vector<32x256xbf16>
    %c3_54 = arith.constant 3 : index
    %c0_55 = arith.constant 0 : index
    %c0_56 = arith.constant 0 : index
    %85 = vector.load %arg6[%c3_54, %c0_55, %c0_56] : memref<7x8x32xbf16, #tpu.memory_space<vmem>>, vector<1x8x32xbf16>
    %86 = vector.shape_cast %85 : vector<1x8x32xbf16> to vector<8x32xbf16>
    %cst_57 = arith.constant dense<0.000000e+00> : vector<8x256xf32>
    %87 = tpu.matmul %86, %84, %cst_57 {dimension_numbers = #tpu.dot_dimension_numbers<[1], [0], [0], [1], [0, 0, 1, 1], [], []>} : vector<8x32xbf16>, vector<32x256xbf16>, vector<8x256xf32> -> vector<8x256xf32>
    %88 = arith.addf %83, %87 : vector<8x256xf32>
    %c0_58 = arith.constant 0 : index
    %c129 = arith.constant 129 : index
    %89 = vector.load %arg9[%c0_58, %c129] : memref<32x387xbf16, #tpu.memory_space<vmem>>, vector<32x256xbf16>
    %c4_59 = arith.constant 4 : index
    %c0_60 = arith.constant 0 : index
    %c0_61 = arith.constant 0 : index
    %90 = vector.load %arg6[%c4_59, %c0_60, %c0_61] : memref<7x8x32xbf16, #tpu.memory_space<vmem>>, vector<1x8x32xbf16>
    %91 = vector.shape_cast %90 : vector<1x8x32xbf16> to vector<8x32xbf16>
    %cst_62 = arith.constant dense<0.000000e+00> : vector<8x256xf32>
    %92 = tpu.matmul %91, %89, %cst_62 {dimension_numbers = #tpu.dot_dimension_numbers<[1], [0], [0], [1], [0, 0, 1, 1], [], []>} : vector<8x32xbf16>, vector<32x256xbf16>, vector<8x256xf32> -> vector<8x256xf32>
    %93 = arith.addf %88, %92 : vector<8x256xf32>
    %c0_63 = arith.constant 0 : index
    %c130 = arith.constant 130 : index
    %94 = vector.load %arg9[%c0_63, %c130] : memref<32x387xbf16, #tpu.memory_space<vmem>>, vector<32x256xbf16>
    %c5_64 = arith.constant 5 : index
    %c0_65 = arith.constant 0 : index
    %c0_66 = arith.constant 0 : index
    %95 = vector.load %arg6[%c5_64, %c0_65, %c0_66] : memref<7x8x32xbf16, #tpu.memory_space<vmem>>, vector<1x8x32xbf16>
    %96 = vector.shape_cast %95 : vector<1x8x32xbf16> to vector<8x32xbf16>
    %cst_67 = arith.constant dense<0.000000e+00> : vector<8x256xf32>
    %97 = tpu.matmul %96, %94, %cst_67 {dimension_numbers = #tpu.dot_dimension_numbers<[1], [0], [0], [1], [0, 0, 1, 1], [], []>} : vector<8x32xbf16>, vector<32x256xbf16>, vector<8x256xf32> -> vector<8x256xf32>
    %98 = arith.addf %93, %97 : vector<8x256xf32>
    %c0_68 = arith.constant 0 : index
    %c131 = arith.constant 131 : index
    %99 = vector.load %arg9[%c0_68, %c131] : memref<32x387xbf16, #tpu.memory_space<vmem>>, vector<32x256xbf16>
    %c6_69 = arith.constant 6 : index
    %c0_70 = arith.constant 0 : index
    %c0_71 = arith.constant 0 : index
    %100 = vector.load %arg6[%c6_69, %c0_70, %c0_71] : memref<7x8x32xbf16, #tpu.memory_space<vmem>>, vector<1x8x32xbf16>
    %101 = vector.shape_cast %100 : vector<1x8x32xbf16> to vector<8x32xbf16>
    %cst_72 = arith.constant dense<0.000000e+00> : vector<8x256xf32>
    %102 = tpu.matmul %101, %99, %cst_72 {dimension_numbers = #tpu.dot_dimension_numbers<[1], [0], [0], [1], [0, 0, 1, 1], [], []>} : vector<8x32xbf16>, vector<32x256xbf16>, vector<8x256xf32> -> vector<8x256xf32>
    %103 = arith.addf %98, %102 : vector<8x256xf32>
    %104 = vector.extract_strided_slice %103 {offsets = [0, 0], sizes = [1, 256], strides = [1, 1]} : vector<8x256xf32> to vector<1x256xf32>
    %c0_73 = arith.constant 0 : index
    %c0_74 = arith.constant 0 : index
    %105 = vector.load %arg7[%c0_73, %c0_74] : memref<1x1xf32, #tpu.memory_space<vmem>>, vector<1x1xf32>
    %106 = vector.broadcast %105 : vector<1x1xf32> to vector<1x256xf32>
    %107 = arith.addf %104, %106 : vector<1x256xf32>
    %cst_75 = arith.constant 0.000000e+00 : f32
    %108 = vector.broadcast %cst_75 : f32 to vector<1x256xf32>
    %109 = arith.cmpf oge, %107, %108 : vector<1x256xf32>
    %cst_76 = arith.constant 1.000000e-01 : f32
    %110 = vector.broadcast %cst_76 : f32 to vector<1x256xf32>
    %111 = arith.mulf %110, %107 : vector<1x256xf32>
    %112 = arith.select %109, %107, %111 : vector<1x256xi1>, vector<1x256xf32>
    %c0_77 = arith.constant 0 : index
    %c0_78 = arith.constant 0 : index
    %c0_79 = arith.constant 0 : index
    %113 = vector.load %arg8[%c0_77, %c0_78, %c0_79] : memref<1x1x256xf32, #tpu.memory_space<vmem>>, vector<1x1x256xf32>
    %114 = vector.shape_cast %113 : vector<1x1x256xf32> to vector<1x256xf32>
    %115 = vector.shape_cast %112 : vector<1x256xf32> to vector<1x1x256xf32>
    tpu.vector_store %arg8[%c0_77, %c0_78, %c0_79], %115 {strides = array<i32>} : memref<1x1x256xf32, #tpu.memory_space<vmem>>, vector<1x1x256xf32>,
    return
  }
  func.func @transform_0(%arg0: i32) -> (i32, i32, i32) {
    %c0_i32 = arith.constant 0 : i32
    %c0_i32_0 = arith.constant 0 : i32
    %c0_i32_1 = arith.constant 0 : i32
    return %arg0, %c0_i32, %c0_i32_0 : i32, i32, i32
  }
  func.func @transform_1(%arg0: i32) -> (i32, i32) {
    %c0_i32 = arith.constant 0 : i32
    %c0_i32_0 = arith.constant 0 : i32
    %c0_i32_1 = arith.constant 0 : i32
    return %c0_i32, %c0_i32_0 : i32, i32
  }
  func.func @transform_2(%arg0: i32) -> (i32, i32) {
    %c0_i32 = arith.constant 0 : i32
    %c0_i32_0 = arith.constant 0 : i32
    %c0_i32_1 = arith.constant 0 : i32
    return %c0_i32, %c0_i32_0 : i32, i32
  }
  func.func @transform_3(%arg0: i32) -> (i32, i32, i32) {
    %c0_i32 = arith.constant 0 : i32
    %c0_i32_0 = arith.constant 0 : i32
    %c0_i32_1 = arith.constant 0 : i32
    %c0_i32_2 = arith.constant 0 : i32
    return %c0_i32, %c0_i32_0, %c0_i32_1 : i32, i32, i32
  }
  func.func @transform_4(%arg0: i32) -> (i32, i32, i32) {
    %c0_i32 = arith.constant 0 : i32
    %c0_i32_0 = arith.constant 0 : i32
    %c0_i32_1 = arith.constant 0 : i32
    %c0_i32_2 = arith.constant 0 : i32
    return %c0_i32, %c0_i32_0, %c0_i32_1 : i32, i32, i32
  }
  func.func @transform_5(%arg0: i32) -> (i32, i32, i32) {
    %c0_i32 = arith.constant 0 : i32
    %c0_i32_0 = arith.constant 0 : i32
    %c0_i32_1 = arith.constant 0 : i32
    %c0_i32_2 = arith.constant 0 : i32
    return %c0_i32, %c0_i32_0, %c0_i32_1 : i32, i32, i32
  }
  func.func @transform_6(%arg0: i32) -> (i32, i32) {
    %c0_i32 = arith.constant 0 : i32
    %c0_i32_0 = arith.constant 0 : i32
    %c0_i32_1 = arith.constant 0 : i32
    return %c0_i32, %c0_i32_0 : i32, i32
  }
  func.func @transform_7(%arg0: i32) -> (i32, i32, i32) {
    %c0_i32 = arith.constant 0 : i32
    %c0_i32_0 = arith.constant 0 : i32
    %c0_i32_1 = arith.constant 0 : i32
    return %arg0, %c0_i32, %c0_i32_0 : i32, i32, i32
  }
}

</mosaic_0001>

<llo_original>
// kernel: net_forward.1
$region0: #{net_forward.1}
  #allocation0 [shape = 'u32[]', space=smem, size = 0x4, offset = 0x4, fixed_abs, tag = 'smem constant byte address 0x4 - core index']
  #allocation1 [shape = 'u32[144,128]{1,0:T(1,128)}', space=vmem, size = 0x12000, scoped, tag = 'internal scratch']
  #allocation2 [shape = 'bf16[32,387]{1,0:T(8,128)(2,1)}', space=vmem, size = 0x8000, scoped, tag = 'scratch operand']
  #allocation3 [shape = 'f32[1,1]{1,0:T(1,128)S(1)}', space=vmem, size = 0x200, scoped, tag = 'scoped memory for net_forward.1']
  %s0 = inlined_call_operand.vmem [shape: f32[3,1,262], index: 0, kind: input, shape index: {}]
  %s1 = inlined_call_operand.vmem [shape: f32[32,7], index: 1, kind: input, shape index: {}]
  %s2 = inlined_call_operand.vmem [shape: f32[32,1], index: 2, kind: input, shape index: {}]
  %s3 = inlined_call_operand.vmem [shape: bf16[35,32,32], index: 3, kind: input, shape index: {}]
  %s4 = inlined_call_operand.vmem [shape: f32[5,32,1], index: 4, kind: input, shape index: {}]
  %s5 = inlined_call_operand.vmem [shape: bf16[7,8,32], index: 5, kind: input, shape index: {}]
  %s6 = inlined_call_operand.<no memory space> [shape: f32[1,1], index: 6, kind: input, shape index: {}]
  %s7 = inlined_call_operand.vmem [shape: f32[3,1,256], index: 7, kind: output, shape index: {}]
  %s8 = sld [smem:[#allocation0]]
  $region68: #{net_forward.1} parent=0
    _
  %s10 = ssub.s32 1, %s8
  %s11 = scalar_select 0, %s10, %s8
  %v12 = vstv %s6
  %13 = vst [vmem:[#allocation3] sm:$0x1] %v12
  loop: start=0, step=1, limit=5
  $region2: #{net_forward.1} parent=0 // loop_pre_header
    _
  $region3: #{net_forward.1} parent=0 // loop_header
    %s15 = sphi 0, %s19
    %p16 = scmp.ge.s32.totalorder %s15, 5
    %s25 = sphi 0, %s27
    %s28 = sphi 0, %s25
    %s29 = sphi 0, %s28
    %s45 = sphi 0, %s29
    %s49 = sphi 0, %s49
    %s51 = sphi 0, %s49
    %s52 = sphi 0, %s51
    %s66 = sphi 0, %s52
    %s70 = sphi 0, %s70
    %s72 = sphi 0, %s70
    %s73 = sphi 0, %s72
    %s87 = sphi 0, %s73
    %s91 = sphi 0, %s91
    %s93 = sphi 0, %s91
    %s94 = sphi 0, %s93
    %s108 = sphi 0, %s94
    %s112 = sphi 0, %s112
    %s114 = sphi 0, %s112
    %s115 = sphi 0, %s114
    %s129 = sphi 0, %s115
    %s133 = sphi 0, %s133
    %s135 = sphi 0, %s133
    %s136 = sphi 0, %s135
    %s150 = sphi 0, %s136
    %s154 = sphi 0, %s154
    %s156 = sphi 0, %s154
    %s157 = sphi 0, %s156
    %s171 = sphi 0, %s157
    %s177 = sphi 0, %s179
    %s180 = sphi 0, %s177
    %s181 = sphi 0, %s180
    %s197 = sphi 0, %s181
  $region4: #{net_forward.1} parent=0 // loop_header_branch
    %18 = sbr.rel (%p16) target = $region8
  $region5: #{net_forward.1} parent=0 // loop_body
    %s20 = ssub.s32 %s15, 1
    %s21 = ssub.s32 %s15, 2
    %s22 = sadd.s32 %s15, 1
    %s23 = ssub.s32 %s15, %s22
    %p24 = scmp.eq.s32.totalorder %s23, 0
    %s26 = sadd.s32 %s25, 1
    %s27 = scalar_select %p24, %s25, %s26
    %p30 = pneg %p24
    %p31 = scmp.eq.s32.totalorder %s15, 2
    %p32 = por %p30, %p31
    %p33 = scmp.ne.s32.totalorder %s25, %s28
    %p34 = scmp.eq.s32.totalorder %s15, 0
    %p35 = por %p33, %p34
    %p36 = scmp.ne.s32.totalorder %s25, %s28
    %p37 = scmp.eq.s32.totalorder %s20, 2
    %p38 = por %p36, %p37
    %p39 = scmp.ne.s32.totalorder %s28, %s29
    %p40 = scmp.eq.s32.totalorder %s20, 0
    %p41 = por %p39, %p40
    %p42 = scmp.ne.s32.totalorder %s28, %s29
    %p43 = scmp.eq.s32.totalorder %s21, 2
    %p44 = por %p42, %p43
    %p46 = scmp.ne.s32.totalorder %s29, %s45
    %p47 = scmp.eq.s32.totalorder %s21, 0
    %p48 = por %p46, %p47
    %s50 = sadd.s32 %s49, 1
    %p53 = scmp.eq.s32.totalorder %s15, 2
    %p54 = scmp.ne.s32.totalorder %s49, %s51
    %p55 = scmp.eq.s32.totalorder %s15, 0
    %p56 = por %p54, %p55
    %p57 = scmp.ne.s32.totalorder %s49, %s51
    %p58 = scmp.eq.s32.totalorder %s20, 2
    %p59 = por %p57, %p58
    %p60 = scmp.ne.s32.totalorder %s51, %s52
    %p61 = scmp.eq.s32.totalorder %s20, 0
    %p62 = por %p60, %p61
    %p63 = scmp.ne.s32.totalorder %s51, %s52
    %p64 = scmp.eq.s32.totalorder %s21, 2
    %p65 = por %p63, %p64
    %p67 = scmp.ne.s32.totalorder %s52, %s66
    %p68 = scmp.eq.s32.totalorder %s21, 0
    %p69 = por %p67, %p68
    %s71 = sadd.s32 %s70, 1
    %p74 = scmp.eq.s32.totalorder %s15, 2
    %p75 = scmp.ne.s32.totalorder %s70, %s72
    %p76 = scmp.eq.s32.totalorder %s15, 0
    %p77 = por %p75, %p76
    %p78 = scmp.ne.s32.totalorder %s70, %s72
    %p79 = scmp.eq.s32.totalorder %s20, 2
    %p80 = por %p78, %p79
    %p81 = scmp.ne.s32.totalorder %s72, %s73
    %p82 = scmp.eq.s32.totalorder %s20, 0
    %p83 = por %p81, %p82
    %p84 = scmp.ne.s32.totalorder %s72, %s73
    %p85 = scmp.eq.s32.totalorder %s21, 2
    %p86 = por %p84, %p85
    %p88 = scmp.ne.s32.totalorder %s73, %s87
    %p89 = scmp.eq.s32.totalorder %s21, 0
    %p90 = por %p88, %p89
    %s92 = sadd.s32 %s91, 1
    %p95 = scmp.eq.s32.totalorder %s15, 2
    %p96 = scmp.ne.s32.totalorder %s91, %s93
    %p97 = scmp.eq.s32.totalorder %s15, 0
    %p98 = por %p96, %p97
    %p99 = scmp.ne.s32.totalorder %s91, %s93
    %p100 = scmp.eq.s32.totalorder %s20, 2
    %p101 = por %p99, %p100
    %p102 = scmp.ne.s32.totalorder %s93, %s94
    %p103 = scmp.eq.s32.totalorder %s20, 0
    %p104 = por %p102, %p103
    %p105 = scmp.ne.s32.totalorder %s93, %s94
    %p106 = scmp.eq.s32.totalorder %s21, 2
    %p107 = por %p105, %p106
    %p109 = scmp.ne.s32.totalorder %s94, %s108
    %p110 = scmp.eq.s32.totalorder %s21, 0
    %p111 = por %p109, %p110
    %s113 = sadd.s32 %s112, 1
    %p116 = scmp.eq.s32.totalorder %s15, 2
    %p117 = scmp.ne.s32.totalorder %s112, %s114
    %p118 = scmp.eq.s32.totalorder %s15, 0
    %p119 = por %p117, %p118
    %p120 = scmp.ne.s32.totalorder %s112, %s114
    %p121 = scmp.eq.s32.totalorder %s20, 2
    %p122 = por %p120, %p121
    %p123 = scmp.ne.s32.totalorder %s114, %s115
    %p124 = scmp.eq.s32.totalorder %s20, 0
    %p125 = por %p123, %p124
    %p126 = scmp.ne.s32.totalorder %s114, %s115
    %p127 = scmp.eq.s32.totalorder %s21, 2
    %p128 = por %p126, %p127
    %p130 = scmp.ne.s32.totalorder %s115, %s129
    %p131 = scmp.eq.s32.totalorder %s21, 0
    %p132 = por %p130, %p131
    %s134 = sadd.s32 %s133, 1
    %p137 = scmp.eq.s32.totalorder %s15, 2
    %p138 = scmp.ne.s32.totalorder %s133, %s135
    %p139 = scmp.eq.s32.totalorder %s15, 0
    %p140 = por %p138, %p139
    %p141 = scmp.ne.s32.totalorder %s133, %s135
    %p142 = scmp.eq.s32.totalorder %s20, 2
    %p143 = por %p141, %p142
    %p144 = scmp.ne.s32.totalorder %s135, %s136
    %p145 = scmp.eq.s32.totalorder %s20, 0
    %p146 = por %p144, %p145
    %p147 = scmp.ne.s32.totalorder %s135, %s136
    %p148 = scmp.eq.s32.totalorder %s21, 2
    %p149 = por %p147, %p148
    %p151 = scmp.ne.s32.totalorder %s136, %s150
    %p152 = scmp.eq.s32.totalorder %s21, 0
    %p153 = por %p151, %p152
    %s155 = sadd.s32 %s154, 1
    %p158 = scmp.eq.s32.totalorder %s15, 2
    %p159 = scmp.ne.s32.totalorder %s154, %s156
    %p160 = scmp.eq.s32.totalorder %s15, 0
    %p161 = por %p159, %p160
    %p162 = scmp.ne.s32.totalorder %s154, %s156
    %p163 = scmp.eq.s32.totalorder %s20, 2
    %p164 = por %p162, %p163
    %p165 = scmp.ne.s32.totalorder %s156, %s157
    %p166 = scmp.eq.s32.totalorder %s20, 0
    %p167 = por %p165, %p166
    %p168 = scmp.ne.s32.totalorder %s156, %s157
    %p169 = scmp.eq.s32.totalorder %s21, 2
    %p170 = por %p168, %p169
    %p172 = scmp.ne.s32.totalorder %s157, %s171
    %p173 = scmp.eq.s32.totalorder %s21, 0
    %p174 = por %p172, %p173
    %s175 = ssub.s32 %s15, %s22
    %p176 = scmp.eq.s32.totalorder %s175, 0
    %s178 = sadd.s32 %s177, 1
    %s179 = scalar_select %p176, %s177, %s178
    %p182 = pneg %p176
    %p183 = scmp.eq.s32.totalorder %s15, 2
    %p184 = por %p182, %p183
    %p185 = scmp.ne.s32.totalorder %s177, %s180
    %p186 = scmp.eq.s32.totalorder %s15, 0
    %p187 = por %p185, %p186
    %p188 = scmp.ne.s32.totalorder %s177, %s180
    %p189 = scmp.eq.s32.totalorder %s20, 2
    %p190 = por %p188, %p189
    %p191 = scmp.ne.s32.totalorder %s180, %s181
    %p192 = scmp.eq.s32.totalorder %s20, 0
    %p193 = por %p191, %p192
    %p194 = scmp.ne.s32.totalorder %s180, %s181
    %p195 = scmp.eq.s32.totalorder %s21, 2
    %p196 = por %p194, %p195
    %p198 = scmp.ne.s32.totalorder %s181, %s197
    %p199 = scmp.eq.s32.totalorder %s21, 0
    %p200 = por %p198, %p199
    %p201 = scmp.le.s32.totalorder 1, %s15
    %p202 = scmp.lt.s32.totalorder %s15, 4
    %p203 = pnand %p201, %p202
    %p204 = pneg %p203
    // Predicated region
    $region9: #{net_forward.1} parent=5 // pred_check
      _
    $region10: #{net_forward.1} parent=5 // pred_check_branch
      %206 = sbr.rel (%p203) target = $region12
    $region11: #{net_forward.1} parent=5 // pred_region
      %s207 = ssub.s32 %s15, 1
      // Predicated region
      $region13: #{net_forward.1} parent=11 // pred_check
        %p208 = pneg %p62
      $region14: #{net_forward.1} parent=11 // pred_check_branch
        %210 = sbr.rel (%p208) target = $region16
      $region15: #{net_forward.1} parent=11 // pred_region
        _
      $region16: #{net_forward.1} parent=11 // pred_fallthru
        _
      // Predicated region
      $region17: #{net_forward.1} parent=11 // pred_check
        %p211 = pneg %p83
      $region18: #{net_forward.1} parent=11 // pred_check_branch
        %213 = sbr.rel (%p211) target = $region20
      $region19: #{net_forward.1} parent=11 // pred_region
        _
      $region20: #{net_forward.1} parent=11 // pred_fallthru
        _
      // Predicated region
      $region21: #{net_forward.1} parent=11 // pred_check
        %p214 = pneg %p104
      $region22: #{net_forward.1} parent=11 // pred_check_branch
        %216 = sbr.rel (%p214) target = $region24
      $region23: #{net_forward.1} parent=11 // pred_region
        _
      $region24: #{net_forward.1} parent=11 // pred_fallthru
        _
      // Predicated region
      $region25: #{net_forward.1} parent=11 // pred_check
        %p217 = pneg %p125
      $region26: #{net_forward.1} parent=11 // pred_check_branch
        %219 = sbr.rel (%p217) target = $region28
      $region27: #{net_forward.1} parent=11 // pred_region
        _
      $region28: #{net_forward.1} parent=11 // pred_fallthru
        _
      // Predicated region
      $region29: #{net_forward.1} parent=11 // pred_check
        %p220 = pneg %p146
      $region30: #{net_forward.1} parent=11 // pred_check_branch
        %222 = sbr.rel (%p220) target = $region32
      $region31: #{net_forward.1} parent=11 // pred_region
        _
      $region32: #{net_forward.1} parent=11 // pred_fallthru
        _
      // Predicated region
      $region33: #{net_forward.1} parent=11 // pred_check
        %p223 = pneg %p167
      $region34: #{net_forward.1} parent=11 // pred_check_branch
        %225 = sbr.rel (%p223) target = $region36
      $region35: #{net_forward.1} parent=11 // pred_region
        _
      $region36: #{net_forward.1} parent=11 // pred_fallthru
        _
    $region12: #{net_forward.1} parent=5 // pred_fallthru
      _
    %p226 = scmp.lt.s32.totalorder %s15, 3
    // Predicated region
    $region37: #{net_forward.1} parent=5 // pred_check
      %p227 = pneg %p226
    $region38: #{net_forward.1} parent=5 // pred_check_branch
      %229 = sbr.rel (%p227) target = $region40
    $region39: #{net_forward.1} parent=5 // pred_region
      // Predicated region
      $region41: #{net_forward.1} parent=39 // pred_check
        %p230 = pneg %p35
      $region42: #{net_forward.1} parent=39 // pred_check_branch
        %232 = sbr.rel (%p230) target = $region44
      $region43: #{net_forward.1} parent=39 // pred_region
        %p233 = scmp.lt.s32.totalorder %s15, 2
        %s234 = scalar_select %p233, %s15, 2
        %s235 = smul.addr %s234, 3
        %s236 = scalar_lea.vmem %s0, %s235
      $region44: #{net_forward.1} parent=39 // pred_fallthru
        _
    $region40: #{net_forward.1} parent=5 // pred_fallthru
      _
    %p237 = scmp.le.s32.totalorder 1, %s15
    %p238 = scmp.lt.s32.totalorder %s15, 4
    %p239 = pnand %p237, %p238
    %p240 = pneg %p239
    // Predicated region
    $region45: #{net_forward.1} parent=5 // pred_check
      _
    $region46: #{net_forward.1} parent=5 // pred_check_branch
      %242 = sbr.rel (%p239) target = $region48
    $region47: #{net_forward.1} parent=5 // pred_region
      %s243 = ssub.s32 %s15, 1
      %p244 = scmp.lt.s32.totalorder %s20, 2
      %s245 = scalar_select %p244, %s20, 2
      %s246 = smul.addr %s245, 3
      %s247 = scalar_lea.vmem %s0, %s246
      %p248 = pneg %p41
      %p249 = pneg %p38
      %p250 = pneg %p62
      %p251 = pneg %p59
      %p252 = pneg %p83
      %p253 = pneg %p80
      %p254 = pneg %p104
      %p255 = pneg %p101
      %p256 = pneg %p125
      %p257 = pneg %p122
      %p258 = pneg %p146
      %p259 = pneg %p143
      %p260 = pneg %p167
      %p261 = pneg %p164
      %p262 = pneg %p193
      %p263 = pneg %p190
      %p264 = scmp.lt.s32.totalorder %s20, 2
      %s265 = scalar_select %p264, %s20, 2
      %s266 = smul.addr %s265, 2
      %s267 = scalar_lea.vmem %s7, %s266
      %p268 = scmp.lt.s32.totalorder %s20, 2
      %s269 = scalar_select %p268, %s20, 2
      %s270 = smul.addr %s269, 3
      %s271 = scalar_lea.vmem %s0, %s270
      %p272 = scmp.lt.s32.totalorder %s20, 2
      %s273 = scalar_select %p272, %s20, 2
      %s274 = smul.addr %s273, 2
      %s275 = scalar_lea.vmem %s7, %s274
      %v277 = vld [vmem:[%s2] sm:$0xff]
      %v278 = vld [vmem:[%s2 + $0x8] sm:$0xff]
      %v279 = vld [vmem:[%s2 + $0x10] sm:$0xff]
      %v280 = vld [vmem:[%s2 + $0x18] sm:$0xff]
      %282 = vset.pattern.permute.xlu0 0
      %283 = vperm.xlu0 %282, %v277
      %v284 = vpop.permute.xlu0 %283
      %287 = vset.pattern.permute.xlu0 0
      %288 = vperm.xlu0 %287, %v278
      %v289 = vpop.permute.xlu0 %288
      %292 = vset.pattern.permute.xlu0 0
      %293 = vperm.xlu0 %292, %v279
      %v294 = vpop.permute.xlu0 %293
      %297 = vset.pattern.permute.xlu0 0
      %298 = vperm.xlu0 %297, %v280
      %v299 = vpop.permute.xlu0 %298
      %v301 = vld [vmem:[%s1] sm:$0xff]
      %v302 = vld [vmem:[%s1 + $0x8] sm:$0xff]
      %v303 = vld [vmem:[%s1 + $0x10] sm:$0xff]
      %v304 = vld [vmem:[%s1 + $0x18] sm:$0xff]
      %v305 = vld [vmem:[%s271] sm:$0x3]
      %307 = vset.pattern.permute.xlu0 0
      %308 = vperm.xlu0 %307, %v301
      %v309 = vpop.permute.xlu0 %308
      %312 = vset.pattern.permute.xlu0 0
      %313 = vperm.xlu0 %312, %v302
      %v314 = vpop.permute.xlu0 %313
      %317 = vset.pattern.permute.xlu0 0
      %318 = vperm.xlu0 %317, %v303
      %v319 = vpop.permute.xlu0 %318
      %322 = vset.pattern.permute.xlu0 0
      %323 = vperm.xlu0 %322, %v304
      %v324 = vpop.permute.xlu0 %323
      %v327 = vlaneseq
      %v328 = vshrl.u32 %v327, 7
      %v329 = vsub.s32 0, %v328
      %v330 = vrot.slane %v305, %v329
      %v331 = vlaneseq
      %v332 = vshrl.u32 %v331, 7
      %v333 = vsub.s32 1, %v332
      %v334 = vrot.slane %v305, %v333
      %v337 = vmul.f32 %v309, %v330
      %v338 = vmul.f32 %v309, %v334
      %v339 = vmul.f32 %v314, %v330
      %v340 = vmul.f32 %v314, %v334
      %v341 = vmul.f32 %v319, %v330
      %v342 = vmul.f32 %v319, %v334
      %v343 = vmul.f32 %v324, %v330
      %v344 = vmul.f32 %v324, %v334
      %v345 = vadd.f32 %v284, %v337
      %v346 = vadd.f32 %v284, %v338
      %v347 = vadd.f32 %v289, %v339
      %v348 = vadd.f32 %v289, %v340
      %v349 = vadd.f32 %v294, %v341
      %v350 = vadd.f32 %v294, %v342
      %v351 = vadd.f32 %v299, %v343
      %v352 = vadd.f32 %v299, %v344
      %v353 = vld [vmem:[%s271] sm:$0x7]
      %354 = vset.pattern.permute.xlu0 1
      %355 = vperm.xlu0 %354, %v301
      %v356 = vpop.permute.xlu0 %355
      %358 = vset.pattern.permute.xlu0 1
      %359 = vperm.xlu0 %358, %v302
      %v360 = vpop.permute.xlu0 %359
      %362 = vset.pattern.permute.xlu0 1
      %363 = vperm.xlu0 %362, %v303
      %v364 = vpop.permute.xlu0 %363
      %366 = vset.pattern.permute.xlu0 1
      %367 = vperm.xlu0 %366, %v304
      %v368 = vpop.permute.xlu0 %367
      %v371 = vlaneseq
      %v372 = vshrl.u32 %v371, 7
      %v373 = vsub.s32 0, %v372
      %v374 = vrot.slane %v353, %v373
      %v375 = vlaneseq
      %v376 = vshrl.u32 %v375, 7
      %v377 = vsub.s32 1, %v376
      %v378 = vrot.slane %v353, %v377
      %v379 = vlaneseq
      %v380 = vshrl.u32 %v379, 7
      %v381 = vsub.s32 2, %v380
      %v382 = vrot.slane %v353, %v381
      %v386 = vmul.f32 %v356, %v374
      %v387 = vmul.f32 %v356, %v378
      %v388 = vmul.f32 %v356, %v382
      %v389 = vmul.f32 %v360, %v374
      %v390 = vmul.f32 %v360, %v378
      %v391 = vmul.f32 %v360, %v382
      %v392 = vmul.f32 %v364, %v374
      %v393 = vmul.f32 %v364, %v378
      %v394 = vmul.f32 %v364, %v382
      %v395 = vmul.f32 %v368, %v374
      %v396 = vmul.f32 %v368, %v378
      %v397 = vmul.f32 %v368, %v382
      %410 = vrot.lane.b32.xlu0 %v386, 127
      %v411 = vpop.permute.xlu0 %410
      %412 = vrot.lane.b32.xlu0 %v387, 127
      %v413 = vpop.permute.xlu0 %412
      %414 = vrot.lane.b32.xlu0 %v388, 127
      %v415 = vpop.permute.xlu0 %414
      %416 = vrot.lane.b32.xlu0 %v389, 127
      %v417 = vpop.permute.xlu0 %416
      %418 = vrot.lane.b32.xlu0 %v390, 127
      %v419 = vpop.permute.xlu0 %418
      %420 = vrot.lane.b32.xlu0 %v391, 127
      %v421 = vpop.permute.xlu0 %420
      %422 = vrot.lane.b32.xlu0 %v392, 127
      %v423 = vpop.permute.xlu0 %422
      %424 = vrot.lane.b32.xlu0 %v393, 127
      %v425 = vpop.permute.xlu0 %424
      %426 = vrot.lane.b32.xlu0 %v394, 127
      %v427 = vpop.permute.xlu0 %426
      %428 = vrot.lane.b32.xlu0 %v395, 127
      %v429 = vpop.permute.xlu0 %428
      %430 = vrot.lane.b32.xlu0 %v396, 127
      %v431 = vpop.permute.xlu0 %430
      %432 = vrot.lane.b32.xlu0 %v397, 127
      %v433 = vpop.permute.xlu0 %432
      %vm434 = vcmask 1039360
      %v435 = vsel %vm434, %v411, %v413
      %v436 = vsel %vm434, %v413, %v415
      %v437 = vsel %vm434, %v417, %v419
      %v438 = vsel %vm434, %v419, %v421
      %v439 = vsel %vm434, %v423, %v425
      %v440 = vsel %vm434, %v425, %v427
      %v441 = vsel %vm434, %v429, %v431
      %v442 = vsel %vm434, %v431, %v433
      %v451 = vadd.f32 %v345, %v435
      %v452 = vadd.f32 %v346, %v436
      %v453 = vadd.f32 %v347, %v437
      %v454 = vadd.f32 %v348, %v438
      %v455 = vadd.f32 %v349, %v439
      %v456 = vadd.f32 %v350, %v440
      %v457 = vadd.f32 %v351, %v441
      %v458 = vadd.f32 %v352, %v442
      %459 = vset.pattern.permute.xlu0 2
      %460 = vperm.xlu0 %459, %v301
      %v461 = vpop.permute.xlu0 %460
      %463 = vset.pattern.permute.xlu0 2
      %464 = vperm.xlu0 %463, %v302
      %v465 = vpop.permute.xlu0 %464
      %467 = vset.pattern.permute.xlu0 2
      %468 = vperm.xlu0 %467, %v303
      %v469 = vpop.permute.xlu0 %468
      %471 = vset.pattern.permute.xlu0 2
      %472 = vperm.xlu0 %471, %v304
      %v473 = vpop.permute.xlu0 %472
      %v475 = vmul.f32 %v461, %v374
      %v476 = vmul.f32 %v461, %v378
      %v477 = vmul.f32 %v461, %v382
      %v478 = vmul.f32 %v465, %v374
      %v479 = vmul.f32 %v465, %v378
      %v480 = vmul.f32 %v465, %v382
      %v481 = vmul.f32 %v469, %v374
      %v482 = vmul.f32 %v469, %v378
      %v483 = vmul.f32 %v469, %v382
      %v484 = vmul.f32 %v473, %v374
      %v485 = vmul.f32 %v473, %v378
      %v486 = vmul.f32 %v473, %v382
      %499 = vrot.lane.b32.xlu0 %v475, 126
      %v500 = vpop.permute.xlu0 %499
      %501 = vrot.lane.b32.xlu0 %v476, 126
      %v502 = vpop.permute.xlu0 %501
      %503 = vrot.lane.b32.xlu0 %v477, 126
      %v504 = vpop.permute.xlu0 %503
      %505 = vrot.lane.b32.xlu0 %v478, 126
      %v506 = vpop.permute.xlu0 %505
      %507 = vrot.lane.b32.xlu0 %v479, 126
      %v508 = vpop.permute.xlu0 %507
      %509 = vrot.lane.b32.xlu0 %v480, 126
      %v510 = vpop.permute.xlu0 %509
      %511 = vrot.lane.b32.xlu0 %v481, 126
      %v512 = vpop.permute.xlu0 %511
      %513 = vrot.lane.b32.xlu0 %v482, 126
      %v514 = vpop.permute.xlu0 %513
      %515 = vrot.lane.b32.xlu0 %v483, 126
      %v516 = vpop.permute.xlu0 %515
      %517 = vrot.lane.b32.xlu0 %v484, 126
      %v518 = vpop.permute.xlu0 %517
      %519 = vrot.lane.b32.xlu0 %v485, 126
      %v520 = vpop.permute.xlu0 %519
      %521 = vrot.lane.b32.xlu0 %v486, 126
      %v522 = vpop.permute.xlu0 %521
      %vm523 = vcmask 1031168
      %v524 = vsel %vm523, %v500, %v502
      %v525 = vsel %vm523, %v502, %v504
      %v526 = vsel %vm523, %v506, %v508
      %v527 = vsel %vm523, %v508, %v510
      %v528 = vsel %vm523, %v512, %v514
      %v529 = vsel %vm523, %v514, %v516
      %v530 = vsel %vm523, %v518, %v520
      %v531 = vsel %vm523, %v520, %v522
      %v540 = vadd.f32 %v451, %v524
      %v541 = vadd.f32 %v452, %v525
      %v542 = vadd.f32 %v453, %v526
      %v543 = vadd.f32 %v454, %v527
      %v544 = vadd.f32 %v455, %v528
      %v545 = vadd.f32 %v456, %v529
      %v546 = vadd.f32 %v457, %v530
      %v547 = vadd.f32 %v458, %v531
      %548 = vset.pattern.permute.xlu0 3
      %549 = vperm.xlu0 %548, %v301
      %v550 = vpop.permute.xlu0 %549
      %552 = vset.pattern.permute.xlu0 3
      %553 = vperm.xlu0 %552, %v302
      %v554 = vpop.permute.xlu0 %553
      %556 = vset.pattern.permute.xlu0 3
      %557 = vperm.xlu0 %556, %v303
      %v558 = vpop.permute.xlu0 %557
      %560 = vset.pattern.permute.xlu0 3
      %561 = vperm.xlu0 %560, %v304
      %v562 = vpop.permute.xlu0 %561
      %v564 = vmul.f32 %v550, %v374
      %v565 = vmul.f32 %v550, %v378
      %v566 = vmul.f32 %v550, %v382
      %v567 = vmul.f32 %v554, %v374
      %v568 = vmul.f32 %v554, %v378
      %v569 = vmul.f32 %v554, %v382
      %v570 = vmul.f32 %v558, %v374
      %v571 = vmul.f32 %v558, %v378
      %v572 = vmul.f32 %v558, %v382
      %v573 = vmul.f32 %v562, %v374
      %v574 = vmul.f32 %v562, %v378
      %v575 = vmul.f32 %v562, %v382
      %588 = vrot.lane.b32.xlu0 %v564, 125
      %v589 = vpop.permute.xlu0 %588
      %590 = vrot.lane.b32.xlu0 %v565, 125
      %v591 = vpop.permute.xlu0 %590
      %592 = vrot.lane.b32.xlu0 %v566, 125
      %v593 = vpop.permute.xlu0 %592
      %594 = vrot.lane.b32.xlu0 %v567, 125
      %v595 = vpop.permute.xlu0 %594
      %596 = vrot.lane.b32.xlu0 %v568, 125
      %v597 = vpop.permute.xlu0 %596
      %598 = vrot.lane.b32.xlu0 %v569, 125
      %v599 = vpop.permute.xlu0 %598
      %600 = vrot.lane.b32.xlu0 %v570, 125
      %v601 = vpop.permute.xlu0 %600
      %602 = vrot.lane.b32.xlu0 %v571, 125
      %v603 = vpop.permute.xlu0 %602
      %604 = vrot.lane.b32.xlu0 %v572, 125
      %v605 = vpop.permute.xlu0 %604
      %606 = vrot.lane.b32.xlu0 %v573, 125
      %v607 = vpop.permute.xlu0 %606
      %608 = vrot.lane.b32.xlu0 %v574, 125
      %v609 = vpop.permute.xlu0 %608
      %610 = vrot.lane.b32.xlu0 %v575, 125
      %v611 = vpop.permute.xlu0 %610
      %vm612 = vcmask 1022976
      %v613 = vsel %vm612, %v589, %v591
      %v614 = vsel %vm612, %v591, %v593
      %v615 = vsel %vm612, %v595, %v597
      %v616 = vsel %vm612, %v597, %v599
      %v617 = vsel %vm612, %v601, %v603
      %v618 = vsel %vm612, %v603, %v605
      %v619 = vsel %vm612, %v607, %v609
      %v620 = vsel %vm612, %v609, %v611
      %v629 = vadd.f32 %v540, %v613
      %v630 = vadd.f32 %v541, %v614
      %v631 = vadd.f32 %v542, %v615
      %v632 = vadd.f32 %v543, %v616
      %v633 = vadd.f32 %v544, %v617
      %v634 = vadd.f32 %v545, %v618
      %v635 = vadd.f32 %v546, %v619
      %v636 = vadd.f32 %v547, %v620
      %637 = vset.pattern.permute.xlu0 4
      %638 = vperm.xlu0 %637, %v301
      %v639 = vpop.permute.xlu0 %638
      %641 = vset.pattern.permute.xlu0 4
      %642 = vperm.xlu0 %641, %v302
      %v643 = vpop.permute.xlu0 %642
      %645 = vset.pattern.permute.xlu0 4
      %646 = vperm.xlu0 %645, %v303
      %v647 = vpop.permute.xlu0 %646
      %649 = vset.pattern.permute.xlu0 4
      %650 = vperm.xlu0 %649, %v304
      %v651 = vpop.permute.xlu0 %650
      %v653 = vmul.f32 %v639, %v374
      %v654 = vmul.f32 %v639, %v378
      %v655 = vmul.f32 %v639, %v382
      %v656 = vmul.f32 %v643, %v374
      %v657 = vmul.f32 %v643, %v378
      %v658 = vmul.f32 %v643, %v382
      %v659 = vmul.f32 %v647, %v374
      %v660 = vmul.f32 %v647, %v378
      %v661 = vmul.f32 %v647, %v382
      %v662 = vmul.f32 %v651, %v374
      %v663 = vmul.f32 %v651, %v378
      %v664 = vmul.f32 %v651, %v382
      %677 = vrot.lane.b32.xlu0 %v653, 124
      %v678 = vpop.permute.xlu0 %677
      %679 = vrot.lane.b32.xlu0 %v654, 124
      %v680 = vpop.permute.xlu0 %679
      %681 = vrot.lane.b32.xlu0 %v655, 124
      %v682 = vpop.permute.xlu0 %681
      %683 = vrot.lane.b32.xlu0 %v656, 124
      %v684 = vpop.permute.xlu0 %683
      %685 = vrot.lane.b32.xlu0 %v657, 124
      %v686 = vpop.permute.xlu0 %685
      %687 = vrot.lane.b32.xlu0 %v658, 124
      %v688 = vpop.permute.xlu0 %687
      %689 = vrot.lane.b32.xlu0 %v659, 124
      %v690 = vpop.permute.xlu0 %689
      %691 = vrot.lane.b32.xlu0 %v660, 124
      %v692 = vpop.permute.xlu0 %691
      %693 = vrot.lane.b32.xlu0 %v661, 124
      %v694 = vpop.permute.xlu0 %693
      %695 = vrot.lane.b32.xlu0 %v662, 124
      %v696 = vpop.permute.xlu0 %695
      %697 = vrot.lane.b32.xlu0 %v663, 124
      %v698 = vpop.permute.xlu0 %697
      %699 = vrot.lane.b32.xlu0 %v664, 124
      %v700 = vpop.permute.xlu0 %699
      %vm701 = vcmask 1014784
      %v702 = vsel %vm701, %v678, %v680
      %v703 = vsel %vm701, %v680, %v682
      %v704 = vsel %vm701, %v684, %v686
      %v705 = vsel %vm701, %v686, %v688
      %v706 = vsel %vm701, %v690, %v692
      %v707 = vsel %vm701, %v692, %v694
      %v708 = vsel %vm701, %v696, %v698
      %v709 = vsel %vm701, %v698, %v700
      %v718 = vadd.f32 %v629, %v702
      %v719 = vadd.f32 %v630, %v703
      %v720 = vadd.f32 %v631, %v704
      %v721 = vadd.f32 %v632, %v705
      %v722 = vadd.f32 %v633, %v706
      %v723 = vadd.f32 %v634, %v707
      %v724 = vadd.f32 %v635, %v708
      %v725 = vadd.f32 %v636, %v709
      %726 = vset.pattern.permute.xlu0 5
      %727 = vperm.xlu0 %726, %v301
      %v728 = vpop.permute.xlu0 %727
      %730 = vset.pattern.permute.xlu0 5
      %731 = vperm.xlu0 %730, %v302
      %v732 = vpop.permute.xlu0 %731
      %734 = vset.pattern.permute.xlu0 5
      %735 = vperm.xlu0 %734, %v303
      %v736 = vpop.permute.xlu0 %735
      %738 = vset.pattern.permute.xlu0 5
      %739 = vperm.xlu0 %738, %v304
      %v740 = vpop.permute.xlu0 %739
      %v742 = vmul.f32 %v728, %v374
      %v743 = vmul.f32 %v728, %v378
      %v744 = vmul.f32 %v728, %v382
      %v745 = vmul.f32 %v732, %v374
      %v746 = vmul.f32 %v732, %v378
      %v747 = vmul.f32 %v732, %v382
      %v748 = vmul.f32 %v736, %v374
      %v749 = vmul.f32 %v736, %v378
      %v750 = vmul.f32 %v736, %v382
      %v751 = vmul.f32 %v740, %v374
      %v752 = vmul.f32 %v740, %v378
      %v753 = vmul.f32 %v740, %v382
      %766 = vrot.lane.b32.xlu0 %v742, 123
      %v767 = vpop.permute.xlu0 %766
      %768 = vrot.lane.b32.xlu0 %v743, 123
      %v769 = vpop.permute.xlu0 %768
      %770 = vrot.lane.b32.xlu0 %v744, 123
      %v771 = vpop.permute.xlu0 %770
      %772 = vrot.lane.b32.xlu0 %v745, 123
      %v773 = vpop.permute.xlu0 %772
      %774 = vrot.lane.b32.xlu0 %v746, 123
      %v775 = vpop.permute.xlu0 %774
      %776 = vrot.lane.b32.xlu0 %v747, 123
      %v777 = vpop.permute.xlu0 %776
      %778 = vrot.lane.b32.xlu0 %v748, 123
      %v779 = vpop.permute.xlu0 %778
      %780 = vrot.lane.b32.xlu0 %v749, 123
      %v781 = vpop.permute.xlu0 %780
      %782 = vrot.lane.b32.xlu0 %v750, 123
      %v783 = vpop.permute.xlu0 %782
      %784 = vrot.lane.b32.xlu0 %v751, 123
      %v785 = vpop.permute.xlu0 %784
      %786 = vrot.lane.b32.xlu0 %v752, 123
      %v787 = vpop.permute.xlu0 %786
      %788 = vrot.lane.b32.xlu0 %v753, 123
      %v789 = vpop.permute.xlu0 %788
      %vm790 = vcmask 1006592
      %v791 = vsel %vm790, %v767, %v769
      %v792 = vsel %vm790, %v769, %v771
      %v793 = vsel %vm790, %v773, %v775
      %v794 = vsel %vm790, %v775, %v777
      %v795 = vsel %vm790, %v779, %v781
      %v796 = vsel %vm790, %v781, %v783
      %v797 = vsel %vm790, %v785, %v787
      %v798 = vsel %vm790, %v787, %v789
      %v807 = vadd.f32 %v718, %v791
      %v808 = vadd.f32 %v719, %v792
      %v809 = vadd.f32 %v720, %v793
      %v810 = vadd.f32 %v721, %v794
      %v811 = vadd.f32 %v722, %v795
      %v812 = vadd.f32 %v723, %v796
      %v813 = vadd.f32 %v724, %v797
      %v814 = vadd.f32 %v725, %v798
      %815 = vset.pattern.permute.xlu0 6
      %816 = vperm.xlu0 %815, %v301
      %v817 = vpop.permute.xlu0 %816
      %819 = vset.pattern.permute.xlu0 6
      %820 = vperm.xlu0 %819, %v302
      %v821 = vpop.permute.xlu0 %820
      %823 = vset.pattern.permute.xlu0 6
      %824 = vperm.xlu0 %823, %v303
      %v825 = vpop.permute.xlu0 %824
      %827 = vset.pattern.permute.xlu0 6
      %828 = vperm.xlu0 %827, %v304
      %v829 = vpop.permute.xlu0 %828
      %v831 = vmul.f32 %v817, %v374
      %v832 = vmul.f32 %v817, %v378
      %v833 = vmul.f32 %v817, %v382
      %v834 = vmul.f32 %v821, %v374
      %v835 = vmul.f32 %v821, %v378
      %v836 = vmul.f32 %v821, %v382
      %v837 = vmul.f32 %v825, %v374
      %v838 = vmul.f32 %v825, %v378
      %v839 = vmul.f32 %v825, %v382
      %v840 = vmul.f32 %v829, %v374
      %v841 = vmul.f32 %v829, %v378
      %v842 = vmul.f32 %v829, %v382
      %855 = vrot.lane.b32.xlu0 %v831, 122
      %v856 = vpop.permute.xlu0 %855
      %857 = vrot.lane.b32.xlu0 %v832, 122
      %v858 = vpop.permute.xlu0 %857
      %859 = vrot.lane.b32.xlu0 %v833, 122
      %v860 = vpop.permute.xlu0 %859
      %861 = vrot.lane.b32.xlu0 %v834, 122
      %v862 = vpop.permute.xlu0 %861
      %863 = vrot.lane.b32.xlu0 %v835, 122
      %v864 = vpop.permute.xlu0 %863
      %865 = vrot.lane.b32.xlu0 %v836, 122
      %v866 = vpop.permute.xlu0 %865
      %867 = vrot.lane.b32.xlu0 %v837, 122
      %v868 = vpop.permute.xlu0 %867
      %869 = vrot.lane.b32.xlu0 %v838, 122
      %v870 = vpop.permute.xlu0 %869
      %871 = vrot.lane.b32.xlu0 %v839, 122
      %v872 = vpop.permute.xlu0 %871
      %873 = vrot.lane.b32.xlu0 %v840, 122
      %v874 = vpop.permute.xlu0 %873
      %875 = vrot.lane.b32.xlu0 %v841, 122
      %v876 = vpop.permute.xlu0 %875
      %877 = vrot.lane.b32.xlu0 %v842, 122
      %v878 = vpop.permute.xlu0 %877
      %vm879 = vcmask 998400
      %v880 = vsel %vm879, %v856, %v858
      %v881 = vsel %vm879, %v858, %v860
      %v882 = vsel %vm879, %v862, %v864
      %v883 = vsel %vm879, %v864, %v866
      %v884 = vsel %vm879, %v868, %v870
      %v885 = vsel %vm879, %v870, %v872
      %v886 = vsel %vm879, %v874, %v876
      %v887 = vsel %vm879, %v876, %v878
      %v896 = vadd.f32 %v807, %v880
      %v897 = vadd.f32 %v808, %v881
      %v898 = vadd.f32 %v809, %v882
      %v899 = vadd.f32 %v810, %v883
      %v900 = vadd.f32 %v811, %v884
      %v901 = vadd.f32 %v812, %v885
      %v902 = vadd.f32 %v813, %v886
      %v903 = vadd.f32 %v814, %v887
      %vm904 = vcmp.ge.f32.partialorder %v896, 0.0
      %vm905 = vcmp.ge.f32.partialorder %v897, 0.0
      %vm906 = vcmp.ge.f32.partialorder %v898, 0.0
      %vm907 = vcmp.ge.f32.partialorder %v899, 0.0
      %vm908 = vcmp.ge.f32.partialorder %v900, 0.0
      %vm909 = vcmp.ge.f32.partialorder %v901, 0.0
      %vm910 = vcmp.ge.f32.partialorder %v902, 0.0
      %vm911 = vcmp.ge.f32.partialorder %v903, 0.0
      %v912 = vmul.f32 %v896, 0.1
      %v913 = vmul.f32 %v897, 0.1
      %v914 = vmul.f32 %v898, 0.1
      %v915 = vmul.f32 %v899, 0.1
      %v916 = vmul.f32 %v900, 0.1
      %v917 = vmul.f32 %v901, 0.1
      %v918 = vmul.f32 %v902, 0.1
      %v919 = vmul.f32 %v903, 0.1
      %v920 = vsel %vm904, %v896, %v912
      %v921 = vsel %vm905, %v897, %v913
      %v922 = vsel %vm906, %v898, %v914
      %v923 = vsel %vm907, %v899, %v915
      %v924 = vsel %vm908, %v900, %v916
      %v925 = vsel %vm909, %v901, %v917
      %v926 = vsel %vm910, %v902, %v918
      %v927 = vsel %vm911, %v903, %v919
      %v928 = vpack.c.bf16 %v922, %v920
      %v929 = vpack.c.bf16 %v923, %v921
      %v930 = vpack.c.bf16 %v926, %v924
      %v931 = vpack.c.bf16 %v927, %v925
      %v936 = vunpack.c.l.b16 %v928
      %v937 = vunpack.c.l.b16 %v929
      %v938 = vunpack.c.h.b16 %v928
      %v939 = vunpack.c.h.b16 %v929
      %v940 = vunpack.c.l.b16 %v930
      %v941 = vunpack.c.l.b16 %v931
      %v942 = vunpack.c.h.b16 %v930
      %v943 = vunpack.c.h.b16 %v931
      %v944 = vpack.c.b16 %v937, %v936
      %v945 = vpack.c.b16 %v939, %v938
      %v946 = vpack.c.b16 %v941, %v940
      %v947 = vpack.c.b16 %v943, %v942
      %952 = vst [vmem:[#allocation2 + $0x4] sm:$0xff] %v944
      %953 = vst [vmem:[#allocation2 + $0x14] sm:$0xff] %v945
      %954 = vst [vmem:[#allocation2 + $0x24] sm:$0xff] %v946
      %955 = vst [vmem:[#allocation2 + $0x34] sm:$0xff] %v947
      %957 = vset.pattern.permute.xlu0 0
      %958 = vperm.xlu0 %957, %v928
      %v959 = vpop.permute.xlu0 %958
      %961 = vset.pattern.permute.xlu0 0
      %962 = vperm.xlu0 %961, %v930
      %v963 = vpop.permute.xlu0 %962
      %v967 = vunpack.c.l.s4 839922192
      %v968 = vunpack.c.0.s8 %v967
      %v969 = vlaneseq
      %v970 = vshrl.u32 %v969, 7
      %v971 = vsub.s32 %v968, %v970
      %v972 = vrot.slane %v959, %v971
      %v974 = vunpack.c.l.s4 1985246804
      %v975 = vunpack.c.0.s8 %v974
      %v976 = vlaneseq
      %v977 = vshrl.u32 %v976, 7
      %v978 = vsub.s32 %v975, %v977
      %v979 = vrot.slane %v959, %v978
      %v981 = vunpack.c.l.s4 839922192
      %v982 = vunpack.c.0.s8 %v981
      %v983 = vlaneseq
      %v984 = vshrl.u32 %v983, 7
      %v985 = vsub.s32 %v982, %v984
      %v986 = vrot.slane %v963, %v985
      %v988 = vunpack.c.l.s4 1985246804
      %v989 = vunpack.c.0.s8 %v988
      %v990 = vlaneseq
      %v991 = vshrl.u32 %v990, 7
      %v992 = vsub.s32 %v989, %v991
      %v993 = vrot.slane %v963, %v992
      %vm998 = vcmask 1044456
      %999 = vst.msk [vmem:[#allocation2] sm:$0xf] %vm998, %v972
      %1000 = vst.msk [vmem:[#allocation2 + $0x10] sm:$0xf] %vm998, %v979
      %1001 = vst.msk [vmem:[#allocation2 + $0x20] sm:$0xf] %vm998, %v986
      %1002 = vst.msk [vmem:[#allocation2 + $0x30] sm:$0xf] %vm998, %v993
      %1004 = vset.pattern.permute.xlu0 127
      %1005 = vperm.xlu0 %1004, %v929
      %v1006 = vpop.permute.xlu0 %1005
      %1008 = vset.pattern.permute.xlu0 127
      %1009 = vperm.xlu0 %1008, %v931
      %v1010 = vpop.permute.xlu0 %1009
      %v1014 = vunpack.c.l.s4 839922192
      %v1015 = vunpack.c.0.s8 %v1014
      %v1016 = vlaneseq
      %v1017 = vshrl.u32 %v1016, 7
      %v1018 = vsub.s32 %v1015, %v1017
      %v1019 = vrot.slane %v1006, %v1018
      %v1021 = vunpack.c.l.s4 1985246804
      %v1022 = vunpack.c.0.s8 %v1021
      %v1023 = vlaneseq
      %v1024 = vshrl.u32 %v1023, 7
      %v1025 = vsub.s32 %v1022, %v1024
      %v1026 = vrot.slane %v1006, %v1025
      %v1028 = vunpack.c.l.s4 839922192
      %v1029 = vunpack.c.0.s8 %v1028
      %v1030 = vlaneseq
      %v1031 = vshrl.u32 %v1030, 7
      %v1032 = vsub.s32 %v1029, %v1031
      %v1033 = vrot.slane %v1010, %v1032
      %v1035 = vunpack.c.l.s4 1985246804
      %v1036 = vunpack.c.0.s8 %v1035
      %v1037 = vlaneseq
      %v1038 = vshrl.u32 %v1037, 7
      %v1039 = vsub.s32 %v1036, %v1038
      %v1040 = vrot.slane %v1010, %v1039
      %vm1045 = vcmask 19456
      %1046 = vst.msk [vmem:[#allocation2 + $0xc] sm:$0xf] %vm1045, %v1019
      %1047 = vst.msk [vmem:[#allocation2 + $0x1c] sm:$0xf] %vm1045, %v1026
      %1048 = vst.msk [vmem:[#allocation2 + $0x2c] sm:$0xf] %vm1045, %v1033
      %1049 = vst.msk [vmem:[#allocation2 + $0x3c] sm:$0xf] %vm1045, %v1040
      loop: start=0, step=1, limit=5
      $region49: #{net_forward.1} parent=47 // loop_pre_header
        _
      $region50: #{net_forward.1} parent=47 // loop_header
        %s1051 = sphi 0, %s1055
        %p1052 = scmp.ge.s32.totalorder %s1051, 5
      $region51: #{net_forward.1} parent=47 // loop_header_branch
        %1054 = sbr.rel (%p1052) target = $region55
      $region52: #{net_forward.1} parent=47 // loop_body
        %s1056 = smul.u32 %s1051, 7
        %s1057 = smul.u32 %s1056, 4
        %s1058 = smul.addr %s1057, 4
        %s1059 = scalar_lea.vmem %s3, %s1058
        %v1060 = vld [vmem:[%s1059] sm:$0xf]
        %v1061 = vld [vmem:[%s1059 + $0x4] sm:$0xf]
        %v1062 = vld [vmem:[%s1059 + $0x8] sm:$0xf]
        %v1063 = vld [vmem:[%s1059 + $0xc] sm:$0xf]
        %v1064 = vld [vmem:[#allocation2] sm:$0xff]
        %v1065 = vld [vmem:[#allocation2 + $0x8] sm:$0xf]
        %v1066 = vld [vmem:[#allocation2 + $0x10] sm:$0xff]
        %v1067 = vld [vmem:[#allocation2 + $0x18] sm:$0xf]
        %v1068 = vld [vmem:[#allocation2 + $0x20] sm:$0xff]
        %v1069 = vld [vmem:[#allocation2 + $0x28] sm:$0xf]
        %v1070 = vld [vmem:[#allocation2 + $0x30] sm:$0xff]
        %v1071 = vld [vmem:[#allocation2 + $0x38] sm:$0xf]
        %s1072 = sadd.s32 %s1056, 1
        %s1073 = smul.u32 %s1072, 4
        %s1074 = smul.addr %s1073, 4
        %s1075 = scalar_lea.vmem %s3, %s1074
        %v1076 = vld [vmem:[%s1075] sm:$0xf]
        %v1077 = vld [vmem:[%s1075 + $0x4] sm:$0xf]
        %v1078 = vld [vmem:[%s1075 + $0x8] sm:$0xf]
        %v1079 = vld [vmem:[%s1075 + $0xc] sm:$0xf]
        %v1084 = vunpack.c.l.b16 %v1076
        %v1085 = vunpack.c.l.b16 %v1077
        %v1086 = vunpack.c.l.b16 %v1078
        %v1087 = vunpack.c.l.b16 %v1079
        %v1088 = vpack.c.b16 %v1085, %v1084
        %v1089 = vpack.c.b16 %v1087, %v1086
        %v1098 = vunpack.c.l.b16 %v1064
        %v1099 = vunpack.c.h.b16 %v1064
        %v1100 = vunpack.c.l.b16 %v1065
        %v1101 = vunpack.c.l.b16 %v1066
        %v1102 = vunpack.c.h.b16 %v1066
        %v1103 = vunpack.c.l.b16 %v1067
        %v1104 = vunpack.c.l.b16 %v1068
        %v1105 = vunpack.c.h.b16 %v1068
        %v1106 = vunpack.c.l.b16 %v1069
        %v1107 = vunpack.c.l.b16 %v1070
        %v1108 = vunpack.c.h.b16 %v1070
        %v1109 = vunpack.c.l.b16 %v1071
        %v1110 = vpack.c.b16 %v1101, %v1098
        %v1111 = vpack.c.b16 %v1102, %v1099
        %v1112 = vpack.c.b16 %v1103, %v1100
        %v1113 = vpack.c.b16 %v1107, %v1104
        %v1114 = vpack.c.b16 %v1108, %v1105
        %v1115 = vpack.c.b16 %v1109, %v1106
        %1116 = vrot.lane.b32.xlu0 %v1110, 2
        %v1117 = vpop.permute.xlu0 %1116
        %1118 = vrot.lane.b32.xlu0 %v1111, 2
        %v1119 = vpop.permute.xlu0 %1118
        %1120 = vrot.lane.b32.xlu0 %v1112, 2
        %v1121 = vpop.permute.xlu0 %1120
        %1122 = vrot.lane.b32.xlu0 %v1113, 2
        %v1123 = vpop.permute.xlu0 %1122
        %1124 = vrot.lane.b32.xlu0 %v1114, 2
        %v1125 = vpop.permute.xlu0 %1124
        %1126 = vrot.lane.b32.xlu0 %v1115, 2
        %v1127 = vpop.permute.xlu0 %1126
        %vm1128 = vcmask 15360
        %v1129 = vsel %vm1128, %v1117, %v1119
        %v1130 = vsel %vm1128, %v1119, %v1121
        %v1131 = vsel %vm1128, %v1123, %v1125
        %v1132 = vsel %vm1128, %v1125, %v1127
        %vm1137 = vcmask 261120
        %v1139 = vsel %vm1137, %v1088, 0
        %v1142 = vsel %vm1137, %v1089, 0
        %1144 = vmatprep.subr.bf16.mxu0 0
        %1145 = vmatpush1.bf16.msra.mxu0 0
        %1146 = vmatprep.subr.bf16.mxu0 0
        %1147 = vmatpush1.bf16.msra.mxu0 0
        %1148 = vmatprep.subr.bf16.mxu0 0
        %1149 = vmatpush1.bf16.msra.mxu0 0
        %1150 = vmatprep.subr.bf16.mxu0 0
        %1151 = vmatpush1.bf16.msra.mxu0 0
        %1152 = vmatprep.subr.bf16.mxu0 0
        %1153 = vmatpush1.bf16.msra.mxu0 0
        %1154 = vmatprep.subr.bf16.mxu0 0
        %1155 = vmatpush1.bf16.msra.mxu0 0
        %1156 = vmatprep.subr.bf16.mxu0 %v1132
        %1157 = vmatpush1.bf16.msra.mxu0 %v1131
        %1158 = vmatprep.subr.bf16.mxu0 %v1130
        %1159 = vmatpush1.bf16.msra.mxu0 %v1129
        %1160 = vmatprep.subr.bf16.mxu0 0
        %1161 = vmatpush2.bf16.msra.mxu0 0
        %1162 = vmatprep.subr.bf16.mxu0 0
        %1163 = vmatpush2.bf16.msra.mxu0 0
        %1164 = vmatprep.subr.bf16.mxu0 0
        %1165 = vmatpush2.bf16.msra.mxu0 0
        %1166 = vmatprep.subr.bf16.mxu0 0
        %1167 = vmatpush2.bf16.msra.mxu0 0
        %1168 = vmatprep.subr.bf16.mxu0 0
        %1169 = vmatpush2.bf16.msra.mxu0 0
        %1170 = vmatprep.subr.bf16.mxu0 0
        %1171 = vmatpush2.bf16.msra.mxu0 0
        %1172 = vmatprep.subr.bf16.mxu0 0
        %1173 = vmatpush2.bf16.msra.mxu0 0
        %1174 = vmatprep.subr.bf16.mxu0 0
        %1175 = vmatpush2.bf16.msra.mxu0 0
        %1176 = vmatprep.mubr.bf16.mxu0 0
        %1177 = vmatmul.mubr.bf16.gmra.mxu0 %v1139
        %v1178 = vpop.f32.mrf.mxu0
        %v1179 = vadd.f32 0.0, %v1178
        %v1180 = vpop.f32.mrf.mxu0
        %v1181 = vadd.f32 0.0, %v1180
        %v1182 = vpop.f32.mrf.mxu0
        %v1183 = vadd.f32 0.0, %v1182
        %v1184 = vpop.f32.mrf.mxu0
        %v1185 = vadd.f32 0.0, %v1184
        %1186 = vmatprep.mubr.bf16.mxu0 0
        %1187 = vmatmul.mubr.bf16.gmra.mxu0 %v1142
        %v1188 = vpop.f32.mrf.mxu0
        %v1189 = vadd.f32 0.0, %v1188
        %v1190 = vpop.f32.mrf.mxu0
        %v1191 = vadd.f32 0.0, %v1190
        %v1192 = vpop.f32.mrf.mxu0
        %v1193 = vadd.f32 0.0, %v1192
        %v1194 = vpop.f32.mrf.mxu0
        %v1195 = vadd.f32 0.0, %v1194
        %1196 = vdwg.mxu0
        %v1201 = vunpack.c.l.b16 %v1060
        %v1202 = vunpack.c.l.b16 %v1061
        %v1203 = vunpack.c.l.b16 %v1062
        %v1204 = vunpack.c.l.b16 %v1063
        %v1205 = vpack.c.b16 %v1202, %v1201
        %v1206 = vpack.c.b16 %v1204, %v1203
        %1207 = vrot.lane.b32.xlu0 %v1110, 3
        %v1208 = vpop.permute.xlu0 %1207
        %1209 = vrot.lane.b32.xlu0 %v1111, 3
        %v1210 = vpop.permute.xlu0 %1209
        %1211 = vrot.lane.b32.xlu0 %v1112, 3
        %v1212 = vpop.permute.xlu0 %1211
        %1213 = vrot.lane.b32.xlu0 %v1113, 3
        %v1214 = vpop.permute.xlu0 %1213
        %1215 = vrot.lane.b32.xlu0 %v1114, 3
        %v1216 = vpop.permute.xlu0 %1215
        %1217 = vrot.lane.b32.xlu0 %v1115, 3
        %v1218 = vpop.permute.xlu0 %1217
        %vm1219 = vcmask 23552
        %v1220 = vsel %vm1219, %v1208, %v1210
        %v1221 = vsel %vm1219, %v1210, %v1212
        %v1222 = vsel %vm1219, %v1214, %v1216
        %v1223 = vsel %vm1219, %v1216, %v1218
        %v1229 = vsel %vm1137, %v1205, 0
        %v1232 = vsel %vm1137, %v1206, 0
        %1234 = vmatprep.subr.bf16.mxu0 0
        %1235 = vmatpush1.bf16.msra.mxu0 0
        %1236 = vmatprep.subr.bf16.mxu0 0
        %1237 = vmatpush1.bf16.msra.mxu0 0
        %1238 = vmatprep.subr.bf16.mxu0 0
        %1239 = vmatpush1.bf16.msra.mxu0 0
        %1240 = vmatprep.subr.bf16.mxu0 0
        %1241 = vmatpush1.bf16.msra.mxu0 0
        %1242 = vmatprep.subr.bf16.mxu0 0
        %1243 = vmatpush1.bf16.msra.mxu0 0
        %1244 = vmatprep.subr.bf16.mxu0 0
        %1245 = vmatpush1.bf16.msra.mxu0 0
        %1246 = vmatprep.subr.bf16.mxu0 %v1223
        %1247 = vmatpush1.bf16.msra.mxu0 %v1222
        %1248 = vmatprep.subr.bf16.mxu0 %v1221
        %1249 = vmatpush1.bf16.msra.mxu0 %v1220
        %1250 = vmatprep.subr.bf16.mxu0 0
        %1251 = vmatpush2.bf16.msra.mxu0 0
        %1252 = vmatprep.subr.bf16.mxu0 0
        %1253 = vmatpush2.bf16.msra.mxu0 0
        %1254 = vmatprep.subr.bf16.mxu0 0
        %1255 = vmatpush2.bf16.msra.mxu0 0
        %1256 = vmatprep.subr.bf16.mxu0 0
        %1257 = vmatpush2.bf16.msra.mxu0 0
        %1258 = vmatprep.subr.bf16.mxu0 0
        %1259 = vmatpush2.bf16.msra.mxu0 0
        %1260 = vmatprep.subr.bf16.mxu0 0
        %1261 = vmatpush2.bf16.msra.mxu0 0
        %1262 = vmatprep.subr.bf16.mxu0 0
        %1263 = vmatpush2.bf16.msra.mxu0 0
        %1264 = vmatprep.subr.bf16.mxu0 0
        %1265 = vmatpush2.bf16.msra.mxu0 0
        %1266 = vmatprep.mubr.bf16.mxu0 0
        %1267 = vmatmul.mubr.bf16.gmra.mxu0 %v1229
        %v1268 = vpop.f32.mrf.mxu0
        %v1269 = vadd.f32 %v1179, %v1268
        %v1270 = vpop.f32.mrf.mxu0
        %v1271 = vadd.f32 %v1181, %v1270
        %v1272 = vpop.f32.mrf.mxu0
        %v1273 = vadd.f32 %v1183, %v1272
        %v1274 = vpop.f32.mrf.mxu0
        %v1275 = vadd.f32 %v1185, %v1274
        %1276 = vmatprep.mubr.bf16.mxu0 0
        %1277 = vmatmul.mubr.bf16.gmra.mxu0 %v1232
        %v1278 = vpop.f32.mrf.mxu0
        %v1279 = vadd.f32 %v1189, %v1278
        %v1280 = vpop.f32.mrf.mxu0
        %v1281 = vadd.f32 %v1191, %v1280
        %v1282 = vpop.f32.mrf.mxu0
        %v1283 = vadd.f32 %v1193, %v1282
        %v1284 = vpop.f32.mrf.mxu0
        %v1285 = vadd.f32 %v1195, %v1284
        %1286 = vdwg.mxu0
        %s1287 = sadd.s32 %s1056, 2
        %s1288 = smul.u32 %s1287, 4
        %s1289 = smul.addr %s1288, 4
        %s1290 = scalar_lea.vmem %s3, %s1289
        %v1291 = vld [vmem:[%s1290] sm:$0xf]
        %v1292 = vld [vmem:[%s1290 + $0x4] sm:$0xf]
        %v1293 = vld [vmem:[%s1290 + $0x8] sm:$0xf]
        %v1294 = vld [vmem:[%s1290 + $0xc] sm:$0xf]
        %v1299 = vunpack.c.l.b16 %v1291
        %v1300 = vunpack.c.l.b16 %v1292
        %v1301 = vunpack.c.l.b16 %v1293
        %v1302 = vunpack.c.l.b16 %v1294
        %v1303 = vpack.c.b16 %v1300, %v1299
        %v1304 = vpack.c.b16 %v1302, %v1301
        %1305 = vrot.lane.b32.xlu0 %v1110, 1
        %v1306 = vpop.permute.xlu0 %1305
        %1307 = vrot.lane.b32.xlu0 %v1111, 1
        %v1308 = vpop.permute.xlu0 %1307
        %1309 = vrot.lane.b32.xlu0 %v1112, 1
        %v1310 = vpop.permute.xlu0 %1309
        %1311 = vrot.lane.b32.xlu0 %v1113, 1
        %v1312 = vpop.permute.xlu0 %1311
        %1313 = vrot.lane.b32.xlu0 %v1114, 1
        %v1314 = vpop.permute.xlu0 %1313
        %1315 = vrot.lane.b32.xlu0 %v1115, 1
        %v1316 = vpop.permute.xlu0 %1315
        %vm1317 = vcmask 7168
        %v1318 = vsel %vm1317, %v1306, %v1308
        %v1319 = vsel %vm1317, %v1308, %v1310
        %v1320 = vsel %vm1317, %v1312, %v1314
        %v1321 = vsel %vm1317, %v1314, %v1316
        %v1327 = vsel %vm1137, %v1303, 0
        %v1330 = vsel %vm1137, %v1304, 0
        %1332 = vmatprep.subr.bf16.mxu0 0
        %1333 = vmatpush1.bf16.msra.mxu0 0
        %1334 = vmatprep.subr.bf16.mxu0 0
        %1335 = vmatpush1.bf16.msra.mxu0 0
        %1336 = vmatprep.subr.bf16.mxu0 0
        %1337 = vmatpush1.bf16.msra.mxu0 0
        %1338 = vmatprep.subr.bf16.mxu0 0
        %1339 = vmatpush1.bf16.msra.mxu0 0
        %1340 = vmatprep.subr.bf16.mxu0 0
        %1341 = vmatpush1.bf16.msra.mxu0 0
        %1342 = vmatprep.subr.bf16.mxu0 0
        %1343 = vmatpush1.bf16.msra.mxu0 0
        %1344 = vmatprep.subr.bf16.mxu0 %v1321
        %1345 = vmatpush1.bf16.msra.mxu0 %v1320
        %1346 = vmatprep.subr.bf16.mxu0 %v1319
        %1347 = vmatpush1.bf16.msra.mxu0 %v1318
        %1348 = vmatprep.subr.bf16.mxu0 0
        %1349 = vmatpush2.bf16.msra.mxu0 0
        %1350 = vmatprep.subr.bf16.mxu0 0
        %1351 = vmatpush2.bf16.msra.mxu0 0
        %1352 = vmatprep.subr.bf16.mxu0 0
        %1353 = vmatpush2.bf16.msra.mxu0 0
        %1354 = vmatprep.subr.bf16.mxu0 0
        %1355 = vmatpush2.bf16.msra.mxu0 0
        %1356 = vmatprep.subr.bf16.mxu0 0
        %1357 = vmatpush2.bf16.msra.mxu0 0
        %1358 = vmatprep.subr.bf16.mxu0 0
        %1359 = vmatpush2.bf16.msra.mxu0 0
        %1360 = vmatprep.subr.bf16.mxu0 0
        %1361 = vmatpush2.bf16.msra.mxu0 0
        %1362 = vmatprep.subr.bf16.mxu0 0
        %1363 = vmatpush2.bf16.msra.mxu0 0
        %1364 = vmatprep.mubr.bf16.mxu0 0
        %1365 = vmatmul.mubr.bf16.gmra.mxu0 %v1327
        %v1366 = vpop.f32.mrf.mxu0
        %v1367 = vadd.f32 0.0, %v1366
        %v1368 = vpop.f32.mrf.mxu0
        %v1369 = vadd.f32 0.0, %v1368
        %v1370 = vpop.f32.mrf.mxu0
        %v1371 = vadd.f32 0.0, %v1370
        %v1372 = vpop.f32.mrf.mxu0
        %v1373 = vadd.f32 0.0, %v1372
        %1374 = vmatprep.mubr.bf16.mxu0 0
        %1375 = vmatmul.mubr.bf16.gmra.mxu0 %v1330
        %v1376 = vpop.f32.mrf.mxu0
        %v1377 = vadd.f32 0.0, %v1376
        %v1378 = vpop.f32.mrf.mxu0
        %v1379 = vadd.f32 0.0, %v1378
        %v1380 = vpop.f32.mrf.mxu0
        %v1381 = vadd.f32 0.0, %v1380
        %v1382 = vpop.f32.mrf.mxu0
        %v1383 = vadd.f32 0.0, %v1382
        %1384 = vdwg.mxu0
        %v1385 = vadd.f32 %v1269, %v1367
        %v1386 = vadd.f32 %v1271, %v1369
        %v1387 = vadd.f32 %v1273, %v1371
        %v1388 = vadd.f32 %v1275, %v1373
        %v1389 = vadd.f32 %v1279, %v1377
        %v1390 = vadd.f32 %v1281, %v1379
        %v1391 = vadd.f32 %v1283, %v1381
        %v1392 = vadd.f32 %v1285, %v1383
        %s1393 = sadd.s32 %s1056, 3
        %s1394 = smul.u32 %s1393, 4
        %s1395 = smul.addr %s1394, 4
        %s1396 = scalar_lea.vmem %s3, %s1395
        %v1397 = vld [vmem:[%s1396] sm:$0xf]
        %v1398 = vld [vmem:[%s1396 + $0x4] sm:$0xf]
        %v1399 = vld [vmem:[%s1396 + $0x8] sm:$0xf]
        %v1400 = vld [vmem:[%s1396 + $0xc] sm:$0xf]
        %v1401 = vld [vmem:[#allocation2 + $0x4] sm:$0xff]
        %v1402 = vld [vmem:[#allocation2 + $0x14] sm:$0xff]
        %v1403 = vld [vmem:[#allocation2 + $0x24] sm:$0xff]
        %v1404 = vld [vmem:[#allocation2 + $0x34] sm:$0xff]
        %v1409 = vunpack.c.l.b16 %v1397
        %v1410 = vunpack.c.l.b16 %v1398
        %v1411 = vunpack.c.l.b16 %v1399
        %v1412 = vunpack.c.l.b16 %v1400
        %v1413 = vpack.c.b16 %v1410, %v1409
        %v1414 = vpack.c.b16 %v1412, %v1411
        %v1419 = vunpack.c.l.b16 %v1401
        %v1420 = vunpack.c.h.b16 %v1401
        %v1421 = vunpack.c.l.b16 %v1402
        %v1422 = vunpack.c.h.b16 %v1402
        %v1423 = vunpack.c.l.b16 %v1403
        %v1424 = vunpack.c.h.b16 %v1403
        %v1425 = vunpack.c.l.b16 %v1404
        %v1426 = vunpack.c.h.b16 %v1404
        %v1427 = vpack.c.b16 %v1421, %v1419
        %v1428 = vpack.c.b16 %v1422, %v1420
        %v1429 = vpack.c.b16 %v1425, %v1423
        %v1430 = vpack.c.b16 %v1426, %v1424
        %v1436 = vsel %vm1137, %v1413, 0
        %v1439 = vsel %vm1137, %v1414, 0
        %1441 = vmatprep.subr.bf16.mxu0 0
        %1442 = vmatpush1.bf16.msra.mxu0 0
        %1443 = vmatprep.subr.bf16.mxu0 0
        %1444 = vmatpush1.bf16.msra.mxu0 0
        %1445 = vmatprep.subr.bf16.mxu0 0
        %1446 = vmatpush1.bf16.msra.mxu0 0
        %1447 = vmatprep.subr.bf16.mxu0 0
        %1448 = vmatpush1.bf16.msra.mxu0 0
        %1449 = vmatprep.subr.bf16.mxu0 0
        %1450 = vmatpush1.bf16.msra.mxu0 0
        %1451 = vmatprep.subr.bf16.mxu0 0
        %1452 = vmatpush1.bf16.msra.mxu0 0
        %1453 = vmatprep.subr.bf16.mxu0 %v1430
        %1454 = vmatpush1.bf16.msra.mxu0 %v1429
        %1455 = vmatprep.subr.bf16.mxu0 %v1428
        %1456 = vmatpush1.bf16.msra.mxu0 %v1427
        %1457 = vmatprep.subr.bf16.mxu0 0
        %1458 = vmatpush2.bf16.msra.mxu0 0
        %1459 = vmatprep.subr.bf16.mxu0 0
        %1460 = vmatpush2.bf16.msra.mxu0 0
        %1461 = vmatprep.subr.bf16.mxu0 0
        %1462 = vmatpush2.bf16.msra.mxu0 0
        %1463 = vmatprep.subr.bf16.mxu0 0
        %1464 = vmatpush2.bf16.msra.mxu0 0
        %1465 = vmatprep.subr.bf16.mxu0 0
        %1466 = vmatpush2.bf16.msra.mxu0 0
        %1467 = vmatprep.subr.bf16.mxu0 0
        %1468 = vmatpush2.bf16.msra.mxu0 0
        %1469 = vmatprep.subr.bf16.mxu0 0
        %1470 = vmatpush2.bf16.msra.mxu0 0
        %1471 = vmatprep.subr.bf16.mxu0 0
        %1472 = vmatpush2.bf16.msra.mxu0 0
        %1473 = vmatprep.mubr.bf16.mxu0 0
        %1474 = vmatmul.mubr.bf16.gmra.mxu0 %v1436
        %v1475 = vpop.f32.mrf.mxu0
        %v1476 = vadd.f32 0.0, %v1475
        %v1477 = vpop.f32.mrf.mxu0
        %v1478 = vadd.f32 0.0, %v1477
        %v1479 = vpop.f32.mrf.mxu0
        %v1480 = vadd.f32 0.0, %v1479
        %v1481 = vpop.f32.mrf.mxu0
        %v1482 = vadd.f32 0.0, %v1481
        %1483 = vmatprep.mubr.bf16.mxu0 0
        %1484 = vmatmul.mubr.bf16.gmra.mxu0 %v1439
        %v1485 = vpop.f32.mrf.mxu0
        %v1486 = vadd.f32 0.0, %v1485
        %v1487 = vpop.f32.mrf.mxu0
        %v1488 = vadd.f32 0.0, %v1487
        %v1489 = vpop.f32.mrf.mxu0
        %v1490 = vadd.f32 0.0, %v1489
        %v1491 = vpop.f32.mrf.mxu0
        %v1492 = vadd.f32 0.0, %v1491
        %1493 = vdwg.mxu0
        %v1494 = vadd.f32 %v1385, %v1476
        %v1495 = vadd.f32 %v1386, %v1478
        %v1496 = vadd.f32 %v1387, %v1480
        %v1497 = vadd.f32 %v1388, %v1482
        %v1498 = vadd.f32 %v1389, %v1486
        %v1499 = vadd.f32 %v1390, %v1488
        %v1500 = vadd.f32 %v1391, %v1490
        %v1501 = vadd.f32 %v1392, %v1492
        %s1502 = sadd.s32 %s1056, 4
        %s1503 = smul.u32 %s1502, 4
        %s1504 = smul.addr %s1503, 4
        %s1505 = scalar_lea.vmem %s3, %s1504
        %v1506 = vld [vmem:[%s1505] sm:$0xf]
        %v1507 = vld [vmem:[%s1505 + $0x4] sm:$0xf]
        %v1508 = vld [vmem:[%s1505 + $0x8] sm:$0xf]
        %v1509 = vld [vmem:[%s1505 + $0xc] sm:$0xf]
        %v1510 = vld [vmem:[#allocation2 + $0x4] sm:$0xff]
        %v1511 = vld [vmem:[#allocation2 + $0xc] sm:$0xf]
        %v1512 = vld [vmem:[#allocation2 + $0x14] sm:$0xff]
        %v1513 = vld [vmem:[#allocation2 + $0x1c] sm:$0xf]
        %v1514 = vld [vmem:[#allocation2 + $0x24] sm:$0xff]
        %v1515 = vld [vmem:[#allocation2 + $0x2c] sm:$0xf]
        %v1516 = vld [vmem:[#allocation2 + $0x34] sm:$0xff]
        %v1517 = vld [vmem:[#allocation2 + $0x3c] sm:$0xf]
        %v1522 = vunpack.c.l.b16 %v1506
        %v1523 = vunpack.c.l.b16 %v1507
        %v1524 = vunpack.c.l.b16 %v1508
        %v1525 = vunpack.c.l.b16 %v1509
        %v1526 = vpack.c.b16 %v1523, %v1522
        %v1527 = vpack.c.b16 %v1525, %v1524
        %v1536 = vunpack.c.l.b16 %v1510
        %v1537 = vunpack.c.h.b16 %v1510
        %v1538 = vunpack.c.l.b16 %v1511
        %v1539 = vunpack.c.l.b16 %v1512
        %v1540 = vunpack.c.h.b16 %v1512
        %v1541 = vunpack.c.l.b16 %v1513
        %v1542 = vunpack.c.l.b16 %v1514
        %v1543 = vunpack.c.h.b16 %v1514
        %v1544 = vunpack.c.l.b16 %v1515
        %v1545 = vunpack.c.l.b16 %v1516
        %v1546 = vunpack.c.h.b16 %v1516
        %v1547 = vunpack.c.l.b16 %v1517
        %v1548 = vpack.c.b16 %v1539, %v1536
        %v1549 = vpack.c.b16 %v1540, %v1537
        %v1550 = vpack.c.b16 %v1541, %v1538
        %v1551 = vpack.c.b16 %v1545, %v1542
        %v1552 = vpack.c.b16 %v1546, %v1543
        %v1553 = vpack.c.b16 %v1547, %v1544
        %1554 = vrot.lane.b32.xlu0 %v1548, 127
        %v1555 = vpop.permute.xlu0 %1554
        %1556 = vrot.lane.b32.xlu0 %v1549, 127
        %v1557 = vpop.permute.xlu0 %1556
        %1558 = vrot.lane.b32.xlu0 %v1550, 127
        %v1559 = vpop.permute.xlu0 %1558
        %1560 = vrot.lane.b32.xlu0 %v1551, 127
        %v1561 = vpop.permute.xlu0 %1560
        %1562 = vrot.lane.b32.xlu0 %v1552, 127
        %v1563 = vpop.permute.xlu0 %1562
        %1564 = vrot.lane.b32.xlu0 %v1553, 127
        %v1565 = vpop.permute.xlu0 %1564
        %vm1566 = vcmask 1039360
        %v1567 = vsel %vm1566, %v1555, %v1557
        %v1568 = vsel %vm1566, %v1557, %v1559
        %v1569 = vsel %vm1566, %v1561, %v1563
        %v1570 = vsel %vm1566, %v1563, %v1565
        %v1576 = vsel %vm1137, %v1526, 0
        %v1579 = vsel %vm1137, %v1527, 0
        %1581 = vmatprep.subr.bf16.mxu0 0
        %1582 = vmatpush1.bf16.msra.mxu0 0
        %1583 = vmatprep.subr.bf16.mxu0 0
        %1584 = vmatpush1.bf16.msra.mxu0 0
        %1585 = vmatprep.subr.bf16.mxu0 0
        %1586 = vmatpush1.bf16.msra.mxu0 0
        %1587 = vmatprep.subr.bf16.mxu0 0
        %1588 = vmatpush1.bf16.msra.mxu0 0
        %1589 = vmatprep.subr.bf16.mxu0 0
        %1590 = vmatpush1.bf16.msra.mxu0 0
        %1591 = vmatprep.subr.bf16.mxu0 0
        %1592 = vmatpush1.bf16.msra.mxu0 0
        %1593 = vmatprep.subr.bf16.mxu0 %v1570
        %1594 = vmatpush1.bf16.msra.mxu0 %v1569
        %1595 = vmatprep.subr.bf16.mxu0 %v1568
        %1596 = vmatpush1.bf16.msra.mxu0 %v1567
        %1597 = vmatprep.subr.bf16.mxu0 0
        %1598 = vmatpush2.bf16.msra.mxu0 0
        %1599 = vmatprep.subr.bf16.mxu0 0
        %1600 = vmatpush2.bf16.msra.mxu0 0
        %1601 = vmatprep.subr.bf16.mxu0 0
        %1602 = vmatpush2.bf16.msra.mxu0 0
        %1603 = vmatprep.subr.bf16.mxu0 0
        %1604 = vmatpush2.bf16.msra.mxu0 0
        %1605 = vmatprep.subr.bf16.mxu0 0
        %1606 = vmatpush2.bf16.msra.mxu0 0
        %1607 = vmatprep.subr.bf16.mxu0 0
        %1608 = vmatpush2.bf16.msra.mxu0 0
        %1609 = vmatprep.subr.bf16.mxu0 0
        %1610 = vmatpush2.bf16.msra.mxu0 0
        %1611 = vmatprep.subr.bf16.mxu0 0
        %1612 = vmatpush2.bf16.msra.mxu0 0
        %1613 = vmatprep.mubr.bf16.mxu0 0
        %1614 = vmatmul.mubr.bf16.gmra.mxu0 %v1576
        %v1615 = vpop.f32.mrf.mxu0
        %v1616 = vadd.f32 0.0, %v1615
        %v1617 = vpop.f32.mrf.mxu0
        %v1618 = vadd.f32 0.0, %v1617
        %v1619 = vpop.f32.mrf.mxu0
        %v1620 = vadd.f32 0.0, %v1619
        %v1621 = vpop.f32.mrf.mxu0
        %v1622 = vadd.f32 0.0, %v1621
        %1623 = vmatprep.mubr.bf16.mxu0 0
        %1624 = vmatmul.mubr.bf16.gmra.mxu0 %v1579
        %v1625 = vpop.f32.mrf.mxu0
        %v1626 = vadd.f32 0.0, %v1625
        %v1627 = vpop.f32.mrf.mxu0
        %v1628 = vadd.f32 0.0, %v1627
        %v1629 = vpop.f32.mrf.mxu0
        %v1630 = vadd.f32 0.0, %v1629
        %v1631 = vpop.f32.mrf.mxu0
        %v1632 = vadd.f32 0.0, %v1631
        %1633 = vdwg.mxu0
        %v1634 = vadd.f32 %v1494, %v1616
        %v1635 = vadd.f32 %v1495, %v1618
        %v1636 = vadd.f32 %v1496, %v1620
        %v1637 = vadd.f32 %v1497, %v1622
        %v1638 = vadd.f32 %v1498, %v1626
        %v1639 = vadd.f32 %v1499, %v1628
        %v1640 = vadd.f32 %v1500, %v1630
        %v1641 = vadd.f32 %v1501, %v1632
        %s1642 = sadd.s32 %s1056, 5
        %s1643 = smul.u32 %s1642, 4
        %s1644 = smul.addr %s1643, 4
        %s1645 = scalar_lea.vmem %s3, %s1644
        %v1646 = vld [vmem:[%s1645] sm:$0xf]
        %v1647 = vld [vmem:[%s1645 + $0x4] sm:$0xf]
        %v1648 = vld [vmem:[%s1645 + $0x8] sm:$0xf]
        %v1649 = vld [vmem:[%s1645 + $0xc] sm:$0xf]
        %v1654 = vunpack.c.l.b16 %v1646
        %v1655 = vunpack.c.l.b16 %v1647
        %v1656 = vunpack.c.l.b16 %v1648
        %v1657 = vunpack.c.l.b16 %v1649
        %v1658 = vpack.c.b16 %v1655, %v1654
        %v1659 = vpack.c.b16 %v1657, %v1656
        %1660 = vrot.lane.b32.xlu0 %v1548, 126
        %v1661 = vpop.permute.xlu0 %1660
        %1662 = vrot.lane.b32.xlu0 %v1549, 126
        %v1663 = vpop.permute.xlu0 %1662
        %1664 = vrot.lane.b32.xlu0 %v1550, 126
        %v1665 = vpop.permute.xlu0 %1664
        %1666 = vrot.lane.b32.xlu0 %v1551, 126
        %v1667 = vpop.permute.xlu0 %1666
        %1668 = vrot.lane.b32.xlu0 %v1552, 126
        %v1669 = vpop.permute.xlu0 %1668
        %1670 = vrot.lane.b32.xlu0 %v1553, 126
        %v1671 = vpop.permute.xlu0 %1670
        %vm1672 = vcmask 1031168
        %v1673 = vsel %vm1672, %v1661, %v1663
        %v1674 = vsel %vm1672, %v1663, %v1665
        %v1675 = vsel %vm1672, %v1667, %v1669
        %v1676 = vsel %vm1672, %v1669, %v1671
        %v1682 = vsel %vm1137, %v1658, 0
        %v1685 = vsel %vm1137, %v1659, 0
        %1687 = vmatprep.subr.bf16.mxu0 0
        %1688 = vmatpush1.bf16.msra.mxu0 0
        %1689 = vmatprep.subr.bf16.mxu0 0
        %1690 = vmatpush1.bf16.msra.mxu0 0
        %1691 = vmatprep.subr.bf16.mxu0 0
        %1692 = vmatpush1.bf16.msra.mxu0 0
        %1693 = vmatprep.subr.bf16.mxu0 0
        %1694 = vmatpush1.bf16.msra.mxu0 0
        %1695 = vmatprep.subr.bf16.mxu0 0
        %1696 = vmatpush1.bf16.msra.mxu0 0
        %1697 = vmatprep.subr.bf16.mxu0 0
        %1698 = vmatpush1.bf16.msra.mxu0 0
        %1699 = vmatprep.subr.bf16.mxu0 %v1676
        %1700 = vmatpush1.bf16.msra.mxu0 %v1675
        %1701 = vmatprep.subr.bf16.mxu0 %v1674
        %1702 = vmatpush1.bf16.msra.mxu0 %v1673
        %1703 = vmatprep.subr.bf16.mxu0 0
        %1704 = vmatpush2.bf16.msra.mxu0 0
        %1705 = vmatprep.subr.bf16.mxu0 0
        %1706 = vmatpush2.bf16.msra.mxu0 0
        %1707 = vmatprep.subr.bf16.mxu0 0
        %1708 = vmatpush2.bf16.msra.mxu0 0
        %1709 = vmatprep.subr.bf16.mxu0 0
        %1710 = vmatpush2.bf16.msra.mxu0 0
        %1711 = vmatprep.subr.bf16.mxu0 0
        %1712 = vmatpush2.bf16.msra.mxu0 0
        %1713 = vmatprep.subr.bf16.mxu0 0
        %1714 = vmatpush2.bf16.msra.mxu0 0
        %1715 = vmatprep.subr.bf16.mxu0 0
        %1716 = vmatpush2.bf16.msra.mxu0 0
        %1717 = vmatprep.subr.bf16.mxu0 0
        %1718 = vmatpush2.bf16.msra.mxu0 0
        %1719 = vmatprep.mubr.bf16.mxu0 0
        %1720 = vmatmul.mubr.bf16.gmra.mxu0 %v1682
        %v1721 = vpop.f32.mrf.mxu0
        %v1722 = vadd.f32 0.0, %v1721
        %v1723 = vpop.f32.mrf.mxu0
        %v1724 = vadd.f32 0.0, %v1723
        %v1725 = vpop.f32.mrf.mxu0
        %v1726 = vadd.f32 0.0, %v1725
        %v1727 = vpop.f32.mrf.mxu0
        %v1728 = vadd.f32 0.0, %v1727
        %1729 = vmatprep.mubr.bf16.mxu0 0
        %1730 = vmatmul.mubr.bf16.gmra.mxu0 %v1685
        %v1731 = vpop.f32.mrf.mxu0
        %v1732 = vadd.f32 0.0, %v1731
        %v1733 = vpop.f32.mrf.mxu0
        %v1734 = vadd.f32 0.0, %v1733
        %v1735 = vpop.f32.mrf.mxu0
        %v1736 = vadd.f32 0.0, %v1735
        %v1737 = vpop.f32.mrf.mxu0
        %v1738 = vadd.f32 0.0, %v1737
        %1739 = vdwg.mxu0
        %v1740 = vadd.f32 %v1634, %v1722
        %v1741 = vadd.f32 %v1635, %v1724
        %v1742 = vadd.f32 %v1636, %v1726
        %v1743 = vadd.f32 %v1637, %v1728
        %v1744 = vadd.f32 %v1638, %v1732
        %v1745 = vadd.f32 %v1639, %v1734
        %v1746 = vadd.f32 %v1640, %v1736
        %v1747 = vadd.f32 %v1641, %v1738
        %s1748 = sadd.s32 %s1056, 6
        %s1749 = smul.u32 %s1748, 4
        %s1750 = smul.addr %s1749, 4
        %s1751 = scalar_lea.vmem %s3, %s1750
        %v1752 = vld [vmem:[%s1751] sm:$0xf]
        %v1753 = vld [vmem:[%s1751 + $0x4] sm:$0xf]
        %v1754 = vld [vmem:[%s1751 + $0x8] sm:$0xf]
        %v1755 = vld [vmem:[%s1751 + $0xc] sm:$0xf]
        %v1760 = vunpack.c.l.b16 %v1752
        %v1761 = vunpack.c.l.b16 %v1753
        %v1762 = vunpack.c.l.b16 %v1754
        %v1763 = vunpack.c.l.b16 %v1755
        %v1764 = vpack.c.b16 %v1761, %v1760
        %v1765 = vpack.c.b16 %v1763, %v1762
        %1766 = vrot.lane.b32.xlu0 %v1548, 125
        %v1767 = vpop.permute.xlu0 %1766
        %1768 = vrot.lane.b32.xlu0 %v1549, 125
        %v1769 = vpop.permute.xlu0 %1768
        %1770 = vrot.lane.b32.xlu0 %v1550, 125
        %v1771 = vpop.permute.xlu0 %1770
        %1772 = vrot.lane.b32.xlu0 %v1551, 125
        %v1773 = vpop.permute.xlu0 %1772
        %1774 = vrot.lane.b32.xlu0 %v1552, 125
        %v1775 = vpop.permute.xlu0 %1774
        %1776 = vrot.lane.b32.xlu0 %v1553, 125
        %v1777 = vpop.permute.xlu0 %1776
        %vm1778 = vcmask 1022976
        %v1779 = vsel %vm1778, %v1767, %v1769
        %v1780 = vsel %vm1778, %v1769, %v1771
        %v1781 = vsel %vm1778, %v1773, %v1775
        %v1782 = vsel %vm1778, %v1775, %v1777
        %v1788 = vsel %vm1137, %v1764, 0
        %v1791 = vsel %vm1137, %v1765, 0
        %1793 = vmatprep.subr.bf16.mxu0 0
        %1794 = vmatpush1.bf16.msra.mxu0 0
        %1795 = vmatprep.subr.bf16.mxu0 0
        %1796 = vmatpush1.bf16.msra.mxu0 0
        %1797 = vmatprep.subr.bf16.mxu0 0
        %1798 = vmatpush1.bf16.msra.mxu0 0
        %1799 = vmatprep.subr.bf16.mxu0 0
        %1800 = vmatpush1.bf16.msra.mxu0 0
        %1801 = vmatprep.subr.bf16.mxu0 0
        %1802 = vmatpush1.bf16.msra.mxu0 0
        %1803 = vmatprep.subr.bf16.mxu0 0
        %1804 = vmatpush1.bf16.msra.mxu0 0
        %1805 = vmatprep.subr.bf16.mxu0 %v1782
        %1806 = vmatpush1.bf16.msra.mxu0 %v1781
        %1807 = vmatprep.subr.bf16.mxu0 %v1780
        %1808 = vmatpush1.bf16.msra.mxu0 %v1779
        %1809 = vmatprep.subr.bf16.mxu0 0
        %1810 = vmatpush2.bf16.msra.mxu0 0
        %1811 = vmatprep.subr.bf16.mxu0 0
        %1812 = vmatpush2.bf16.msra.mxu0 0
        %1813 = vmatprep.subr.bf16.mxu0 0
        %1814 = vmatpush2.bf16.msra.mxu0 0
        %1815 = vmatprep.subr.bf16.mxu0 0
        %1816 = vmatpush2.bf16.msra.mxu0 0
        %1817 = vmatprep.subr.bf16.mxu0 0
        %1818 = vmatpush2.bf16.msra.mxu0 0
        %1819 = vmatprep.subr.bf16.mxu0 0
        %1820 = vmatpush2.bf16.msra.mxu0 0
        %1821 = vmatprep.subr.bf16.mxu0 0
        %1822 = vmatpush2.bf16.msra.mxu0 0
        %1823 = vmatprep.subr.bf16.mxu0 0
        %1824 = vmatpush2.bf16.msra.mxu0 0
        %1825 = vmatprep.mubr.bf16.mxu0 0
        %1826 = vmatmul.mubr.bf16.gmra.mxu0 %v1788
        %v1827 = vpop.f32.mrf.mxu0
        %v1828 = vadd.f32 0.0, %v1827
        %v1829 = vpop.f32.mrf.mxu0
        %v1830 = vadd.f32 0.0, %v1829
        %v1831 = vpop.f32.mrf.mxu0
        %v1832 = vadd.f32 0.0, %v1831
        %v1833 = vpop.f32.mrf.mxu0
        %v1834 = vadd.f32 0.0, %v1833
        %1835 = vmatprep.mubr.bf16.mxu0 0
        %1836 = vmatmul.mubr.bf16.gmra.mxu0 %v1791
        %v1837 = vpop.f32.mrf.mxu0
        %v1838 = vadd.f32 0.0, %v1837
        %v1839 = vpop.f32.mrf.mxu0
        %v1840 = vadd.f32 0.0, %v1839
        %v1841 = vpop.f32.mrf.mxu0
        %v1842 = vadd.f32 0.0, %v1841
        %v1843 = vpop.f32.mrf.mxu0
        %v1844 = vadd.f32 0.0, %v1843
        %1845 = vdwg.mxu0
        %v1846 = vadd.f32 %v1740, %v1828
        %v1847 = vadd.f32 %v1741, %v1830
        %v1848 = vadd.f32 %v1742, %v1832
        %v1849 = vadd.f32 %v1743, %v1834
        %v1850 = vadd.f32 %v1744, %v1838
        %v1851 = vadd.f32 %v1745, %v1840
        %v1852 = vadd.f32 %v1746, %v1842
        %v1853 = vadd.f32 %v1747, %v1844
        %s1854 = smul.u32 %s1051, 32
        %s1855 = scalar_lea.vmem %s4, %s1854
        %v1856 = vld [vmem:[%s1855] sm:$0xff]
        %v1857 = vld [vmem:[%s1855 + $0x8] sm:$0xff]
        %v1858 = vld [vmem:[%s1855 + $0x10] sm:$0xff]
        %v1859 = vld [vmem:[%s1855 + $0x18] sm:$0xff]
        %1861 = vset.pattern.permute.xlu0 0
        %1862 = vperm.xlu0 %1861, %v1856
        %v1863 = vpop.permute.xlu0 %1862
        %1866 = vset.pattern.permute.xlu0 0
        %1867 = vperm.xlu0 %1866, %v1857
        %v1868 = vpop.permute.xlu0 %1867
        %1871 = vset.pattern.permute.xlu0 0
        %1872 = vperm.xlu0 %1871, %v1858
        %v1873 = vpop.permute.xlu0 %1872
        %1876 = vset.pattern.permute.xlu0 0
        %1877 = vperm.xlu0 %1876, %v1859
        %v1878 = vpop.permute.xlu0 %1877
        %v1880 = vadd.f32 %v1846, %v1863
        %v1881 = vadd.f32 %v1847, %v1863
        %v1882 = vadd.f32 %v1848, %v1868
        %v1883 = vadd.f32 %v1849, %v1868
        %v1884 = vadd.f32 %v1850, %v1873
        %v1885 = vadd.f32 %v1851, %v1873
        %v1886 = vadd.f32 %v1852, %v1878
        %v1887 = vadd.f32 %v1853, %v1878
        %vm1888 = vcmp.ge.f32.partialorder %v1880, 0.0
        %vm1889 = vcmp.ge.f32.partialorder %v1881, 0.0
        %vm1890 = vcmp.ge.f32.partialorder %v1882, 0.0
        %vm1891 = vcmp.ge.f32.partialorder %v1883, 0.0
        %vm1892 = vcmp.ge.f32.partialorder %v1884, 0.0
        %vm1893 = vcmp.ge.f32.partialorder %v1885, 0.0
        %vm1894 = vcmp.ge.f32.partialorder %v1886, 0.0
        %vm1895 = vcmp.ge.f32.partialorder %v1887, 0.0
        %v1896 = vmul.f32 %v1880, 0.1
        %v1897 = vmul.f32 %v1881, 0.1
        %v1898 = vmul.f32 %v1882, 0.1
        %v1899 = vmul.f32 %v1883, 0.1
        %v1900 = vmul.f32 %v1884, 0.1
        %v1901 = vmul.f32 %v1885, 0.1
        %v1902 = vmul.f32 %v1886, 0.1
        %v1903 = vmul.f32 %v1887, 0.1
        %v1904 = vsel %vm1888, %v1880, %v1896
        %v1905 = vsel %vm1889, %v1881, %v1897
        %v1906 = vsel %vm1890, %v1882, %v1898
        %v1907 = vsel %vm1891, %v1883, %v1899
        %v1908 = vsel %vm1892, %v1884, %v1900
        %v1909 = vsel %vm1893, %v1885, %v1901
        %v1910 = vsel %vm1894, %v1886, %v1902
        %v1911 = vsel %vm1895, %v1887, %v1903
        %v1912 = vpack.c.bf16 %v1906, %v1904
        %v1913 = vpack.c.bf16 %v1907, %v1905
        %v1914 = vpack.c.bf16 %v1910, %v1908
        %v1915 = vpack.c.bf16 %v1911, %v1909
        %v1920 = vunpack.c.l.b16 %v1912
        %v1921 = vunpack.c.l.b16 %v1913
        %v1922 = vunpack.c.h.b16 %v1912
        %v1923 = vunpack.c.h.b16 %v1913
        %v1924 = vunpack.c.l.b16 %v1914
        %v1925 = vunpack.c.l.b16 %v1915
        %v1926 = vunpack.c.h.b16 %v1914
        %v1927 = vunpack.c.h.b16 %v1915
        %v1928 = vpack.c.b16 %v1921, %v1920
        %v1929 = vpack.c.b16 %v1923, %v1922
        %v1930 = vpack.c.b16 %v1925, %v1924
        %v1931 = vpack.c.b16 %v1927, %v1926
        %1936 = vst [vmem:[#allocation2 + $0x4] sm:$0xff] %v1928
        %1937 = vst [vmem:[#allocation2 + $0x14] sm:$0xff] %v1929
        %1938 = vst [vmem:[#allocation2 + $0x24] sm:$0xff] %v1930
        %1939 = vst [vmem:[#allocation2 + $0x34] sm:$0xff] %v1931
        %1941 = vset.pattern.permute.xlu0 0
        %1942 = vperm.xlu0 %1941, %v1912
        %v1943 = vpop.permute.xlu0 %1942
        %1945 = vset.pattern.permute.xlu0 0
        %1946 = vperm.xlu0 %1945, %v1914
        %v1947 = vpop.permute.xlu0 %1946
        %v1951 = vunpack.c.l.s4 839922192
        %v1952 = vunpack.c.0.s8 %v1951
        %v1953 = vlaneseq
        %v1954 = vshrl.u32 %v1953, 7
        %v1955 = vsub.s32 %v1952, %v1954
        %v1956 = vrot.slane %v1943, %v1955
        %v1958 = vunpack.c.l.s4 1985246804
        %v1959 = vunpack.c.0.s8 %v1958
        %v1960 = vlaneseq
        %v1961 = vshrl.u32 %v1960, 7
        %v1962 = vsub.s32 %v1959, %v1961
        %v1963 = vrot.slane %v1943, %v1962
        %v1965 = vunpack.c.l.s4 839922192
        %v1966 = vunpack.c.0.s8 %v1965
        %v1967 = vlaneseq
        %v1968 = vshrl.u32 %v1967, 7
        %v1969 = vsub.s32 %v1966, %v1968
        %v1970 = vrot.slane %v1947, %v1969
        %v1972 = vunpack.c.l.s4 1985246804
        %v1973 = vunpack.c.0.s8 %v1972
        %v1974 = vlaneseq
        %v1975 = vshrl.u32 %v1974, 7
        %v1976 = vsub.s32 %v1973, %v1975
        %v1977 = vrot.slane %v1947, %v1976
        %1982 = vst.msk [vmem:[#allocation2] sm:$0xf] %vm998, %v1956
        %1983 = vst.msk [vmem:[#allocation2 + $0x10] sm:$0xf] %vm998, %v1963
        %1984 = vst.msk [vmem:[#allocation2 + $0x20] sm:$0xf] %vm998, %v1970
        %1985 = vst.msk [vmem:[#allocation2 + $0x30] sm:$0xf] %vm998, %v1977
        %1987 = vset.pattern.permute.xlu0 127
        %1988 = vperm.xlu0 %1987, %v1913
        %v1989 = vpop.permute.xlu0 %1988
        %1991 = vset.pattern.permute.xlu0 127
        %1992 = vperm.xlu0 %1991, %v1915
        %v1993 = vpop.permute.xlu0 %1992
        %v1997 = vunpack.c.l.s4 839922192
        %v1998 = vunpack.c.0.s8 %v1997
        %v1999 = vlaneseq
        %v2000 = vshrl.u32 %v1999, 7
        %v2001 = vsub.s32 %v1998, %v2000
        %v2002 = vrot.slane %v1989, %v2001
        %v2004 = vunpack.c.l.s4 1985246804
        %v2005 = vunpack.c.0.s8 %v2004
        %v2006 = vlaneseq
        %v2007 = vshrl.u32 %v2006, 7
        %v2008 = vsub.s32 %v2005, %v2007
        %v2009 = vrot.slane %v1989, %v2008
        %v2011 = vunpack.c.l.s4 839922192
        %v2012 = vunpack.c.0.s8 %v2011
        %v2013 = vlaneseq
        %v2014 = vshrl.u32 %v2013, 7
        %v2015 = vsub.s32 %v2012, %v2014
        %v2016 = vrot.slane %v1993, %v2015
        %v2018 = vunpack.c.l.s4 1985246804
        %v2019 = vunpack.c.0.s8 %v2018
        %v2020 = vlaneseq
        %v2021 = vshrl.u32 %v2020, 7
        %v2022 = vsub.s32 %v2019, %v2021
        %v2023 = vrot.slane %v1993, %v2022
        %2028 = vst.msk [vmem:[#allocation2 + $0xc] sm:$0xf] %vm1045, %v2002
        %2029 = vst.msk [vmem:[#allocation2 + $0x1c] sm:$0xf] %vm1045, %v2009
        %2030 = vst.msk [vmem:[#allocation2 + $0x2c] sm:$0xf] %vm1045, %v2016
        %2031 = vst.msk [vmem:[#allocation2 + $0x3c] sm:$0xf] %vm1045, %v2023
      $region53: #{net_forward.1} parent=47 // loop_footer
        %s1055 = sadd.s32 1, %s1051
      $region54: #{net_forward.1} parent=47 // loop_footer_branch
        %1050 = sbr.rel target = $region50
      $region55: #{net_forward.1} parent=47 // loop_exit
        _
      %v2032 = vld [vmem:[#allocation2] sm:$0xff]
      %v2033 = vld [vmem:[#allocation2 + $0x8] sm:$0xf]
      %v2034 = vld [vmem:[#allocation2 + $0x10] sm:$0xff]
      %v2035 = vld [vmem:[#allocation2 + $0x18] sm:$0xf]
      %v2036 = vld [vmem:[#allocation2 + $0x20] sm:$0xff]
      %v2037 = vld [vmem:[#allocation2 + $0x28] sm:$0xf]
      %v2038 = vld [vmem:[#allocation2 + $0x30] sm:$0xff]
      %v2039 = vld [vmem:[#allocation2 + $0x38] sm:$0xf]
      %v2040 = vld [vmem:[%s5] sm:$0xf]
      %s2041 = scalar_lea.vmem %s5, 4
      %v2042 = vld [vmem:[%s2041] sm:$0xf]
      %v2051 = vunpack.c.l.b16 %v2032
      %v2052 = vunpack.c.h.b16 %v2032
      %v2053 = vunpack.c.l.b16 %v2033
      %v2054 = vunpack.c.l.b16 %v2034
      %v2055 = vunpack.c.h.b16 %v2034
      %v2056 = vunpack.c.l.b16 %v2035
      %v2057 = vunpack.c.l.b16 %v2036
      %v2058 = vunpack.c.h.b16 %v2036
      %v2059 = vunpack.c.l.b16 %v2037
      %v2060 = vunpack.c.l.b16 %v2038
      %v2061 = vunpack.c.h.b16 %v2038
      %v2062 = vunpack.c.l.b16 %v2039
      %v2063 = vpack.c.b16 %v2054, %v2051
      %v2064 = vpack.c.b16 %v2055, %v2052
      %v2065 = vpack.c.b16 %v2056, %v2053
      %v2066 = vpack.c.b16 %v2060, %v2057
      %v2067 = vpack.c.b16 %v2061, %v2058
      %v2068 = vpack.c.b16 %v2062, %v2059
      %2069 = vrot.lane.b32.xlu0 %v2063, 2
      %v2070 = vpop.permute.xlu0 %2069
      %2071 = vrot.lane.b32.xlu0 %v2064, 2
      %v2072 = vpop.permute.xlu0 %2071
      %2073 = vrot.lane.b32.xlu0 %v2065, 2
      %v2074 = vpop.permute.xlu0 %2073
      %2075 = vrot.lane.b32.xlu0 %v2066, 2
      %v2076 = vpop.permute.xlu0 %2075
      %2077 = vrot.lane.b32.xlu0 %v2067, 2
      %v2078 = vpop.permute.xlu0 %2077
      %2079 = vrot.lane.b32.xlu0 %v2068, 2
      %v2080 = vpop.permute.xlu0 %2079
      %vm2081 = vcmask 15360
      %v2082 = vsel %vm2081, %v2070, %v2072
      %v2083 = vsel %vm2081, %v2072, %v2074
      %v2084 = vsel %vm2081, %v2076, %v2078
      %v2085 = vsel %vm2081, %v2078, %v2080
      %vm2090 = vcmask 261120
      %v2092 = vsel %vm2090, %v2042, 0
      %2094 = vmatprep.subr.bf16.mxu0 0
      %2095 = vmatpush1.bf16.msra.mxu0 0
      %2096 = vmatprep.subr.bf16.mxu0 0
      %2097 = vmatpush1.bf16.msra.mxu0 0
      %2098 = vmatprep.subr.bf16.mxu0 0
      %2099 = vmatpush1.bf16.msra.mxu0 0
      %2100 = vmatprep.subr.bf16.mxu0 0
      %2101 = vmatpush1.bf16.msra.mxu0 0
      %2102 = vmatprep.subr.bf16.mxu0 0
      %2103 = vmatpush1.bf16.msra.mxu0 0
      %2104 = vmatprep.subr.bf16.mxu0 0
      %2105 = vmatpush1.bf16.msra.mxu0 0
      %2106 = vmatprep.subr.bf16.mxu0 %v2085
      %2107 = vmatpush1.bf16.msra.mxu0 %v2084
      %2108 = vmatprep.subr.bf16.mxu0 %v2083
      %2109 = vmatpush1.bf16.msra.mxu0 %v2082
      %2110 = vmatprep.subr.bf16.mxu0 0
      %2111 = vmatpush2.bf16.msra.mxu0 0
      %2112 = vmatprep.subr.bf16.mxu0 0
      %2113 = vmatpush2.bf16.msra.mxu0 0
      %2114 = vmatprep.subr.bf16.mxu0 0
      %2115 = vmatpush2.bf16.msra.mxu0 0
      %2116 = vmatprep.subr.bf16.mxu0 0
      %2117 = vmatpush2.bf16.msra.mxu0 0
      %2118 = vmatprep.subr.bf16.mxu0 0
      %2119 = vmatpush2.bf16.msra.mxu0 0
      %2120 = vmatprep.subr.bf16.mxu0 0
      %2121 = vmatpush2.bf16.msra.mxu0 0
      %2122 = vmatprep.subr.bf16.mxu0 0
      %2123 = vmatpush2.bf16.msra.mxu0 0
      %2124 = vmatprep.subr.bf16.mxu0 0
      %2125 = vmatpush2.bf16.msra.mxu0 0
      %2126 = vmatprep.mubr.bf16.mxu0 0
      %2127 = vmatmul.mubr.bf16.gmra.mxu0 %v2092
      %v2128 = vpop.f32.mrf.mxu0
      %v2129 = vadd.f32 0.0, %v2128
      %v2130 = vpop.f32.mrf.mxu0
      %v2131 = vadd.f32 0.0, %v2130
      %v2132 = vpop.f32.mrf.mxu0
      %v2133 = vpop.f32.mrf.mxu0
      %2134 = vdwg.mxu0
      %2135 = vrot.lane.b32.xlu0 %v2063, 3
      %v2136 = vpop.permute.xlu0 %2135
      %2137 = vrot.lane.b32.xlu0 %v2064, 3
      %v2138 = vpop.permute.xlu0 %2137
      %2139 = vrot.lane.b32.xlu0 %v2065, 3
      %v2140 = vpop.permute.xlu0 %2139
      %2141 = vrot.lane.b32.xlu0 %v2066, 3
      %v2142 = vpop.permute.xlu0 %2141
      %2143 = vrot.lane.b32.xlu0 %v2067, 3
      %v2144 = vpop.permute.xlu0 %2143
      %2145 = vrot.lane.b32.xlu0 %v2068, 3
      %v2146 = vpop.permute.xlu0 %2145
      %vm2147 = vcmask 23552
      %v2148 = vsel %vm2147, %v2136, %v2138
      %v2149 = vsel %vm2147, %v2138, %v2140
      %v2150 = vsel %vm2147, %v2142, %v2144
      %v2151 = vsel %vm2147, %v2144, %v2146
      %v2157 = vsel %vm2090, %v2040, 0
      %2159 = vmatprep.subr.bf16.mxu0 0
      %2160 = vmatpush1.bf16.msra.mxu0 0
      %2161 = vmatprep.subr.bf16.mxu0 0
      %2162 = vmatpush1.bf16.msra.mxu0 0
      %2163 = vmatprep.subr.bf16.mxu0 0
      %2164 = vmatpush1.bf16.msra.mxu0 0
      %2165 = vmatprep.subr.bf16.mxu0 0
      %2166 = vmatpush1.bf16.msra.mxu0 0
      %2167 = vmatprep.subr.bf16.mxu0 0
      %2168 = vmatpush1.bf16.msra.mxu0 0
      %2169 = vmatprep.subr.bf16.mxu0 0
      %2170 = vmatpush1.bf16.msra.mxu0 0
      %2171 = vmatprep.subr.bf16.mxu0 %v2151
      %2172 = vmatpush1.bf16.msra.mxu0 %v2150
      %2173 = vmatprep.subr.bf16.mxu0 %v2149
      %2174 = vmatpush1.bf16.msra.mxu0 %v2148
      %2175 = vmatprep.subr.bf16.mxu0 0
      %2176 = vmatpush2.bf16.msra.mxu0 0
      %2177 = vmatprep.subr.bf16.mxu0 0
      %2178 = vmatpush2.bf16.msra.mxu0 0
      %2179 = vmatprep.subr.bf16.mxu0 0
      %2180 = vmatpush2.bf16.msra.mxu0 0
      %2181 = vmatprep.subr.bf16.mxu0 0
      %2182 = vmatpush2.bf16.msra.mxu0 0
      %2183 = vmatprep.subr.bf16.mxu0 0
      %2184 = vmatpush2.bf16.msra.mxu0 0
      %2185 = vmatprep.subr.bf16.mxu0 0
      %2186 = vmatpush2.bf16.msra.mxu0 0
      %2187 = vmatprep.subr.bf16.mxu0 0
      %2188 = vmatpush2.bf16.msra.mxu0 0
      %2189 = vmatprep.subr.bf16.mxu0 0
      %2190 = vmatpush2.bf16.msra.mxu0 0
      %2191 = vmatprep.mubr.bf16.mxu0 0
      %2192 = vmatmul.mubr.bf16.gmra.mxu0 %v2157
      %v2193 = vpop.f32.mrf.mxu0
      %v2194 = vadd.f32 %v2129, %v2193
      %v2195 = vpop.f32.mrf.mxu0
      %v2196 = vadd.f32 %v2131, %v2195
      %v2197 = vpop.f32.mrf.mxu0
      %v2198 = vpop.f32.mrf.mxu0
      %2199 = vdwg.mxu0
      %s2200 = scalar_lea.vmem %s5, 8
      %v2201 = vld [vmem:[%s2200] sm:$0xf]
      %2202 = vrot.lane.b32.xlu0 %v2063, 1
      %v2203 = vpop.permute.xlu0 %2202
      %2204 = vrot.lane.b32.xlu0 %v2064, 1
      %v2205 = vpop.permute.xlu0 %2204
      %2206 = vrot.lane.b32.xlu0 %v2065, 1
      %v2207 = vpop.permute.xlu0 %2206
      %2208 = vrot.lane.b32.xlu0 %v2066, 1
      %v2209 = vpop.permute.xlu0 %2208
      %2210 = vrot.lane.b32.xlu0 %v2067, 1
      %v2211 = vpop.permute.xlu0 %2210
      %2212 = vrot.lane.b32.xlu0 %v2068, 1
      %v2213 = vpop.permute.xlu0 %2212
      %vm2214 = vcmask 7168
      %v2215 = vsel %vm2214, %v2203, %v2205
      %v2216 = vsel %vm2214, %v2205, %v2207
      %v2217 = vsel %vm2214, %v2209, %v2211
      %v2218 = vsel %vm2214, %v2211, %v2213
      %v2224 = vsel %vm2090, %v2201, 0
      %2226 = vmatprep.subr.bf16.mxu0 0
      %2227 = vmatpush1.bf16.msra.mxu0 0
      %2228 = vmatprep.subr.bf16.mxu0 0
      %2229 = vmatpush1.bf16.msra.mxu0 0
      %2230 = vmatprep.subr.bf16.mxu0 0
      %2231 = vmatpush1.bf16.msra.mxu0 0
      %2232 = vmatprep.subr.bf16.mxu0 0
      %2233 = vmatpush1.bf16.msra.mxu0 0
      %2234 = vmatprep.subr.bf16.mxu0 0
      %2235 = vmatpush1.bf16.msra.mxu0 0
      %2236 = vmatprep.subr.bf16.mxu0 0
      %2237 = vmatpush1.bf16.msra.mxu0 0
      %2238 = vmatprep.subr.bf16.mxu0 %v2218
      %2239 = vmatpush1.bf16.msra.mxu0 %v2217
      %2240 = vmatprep.subr.bf16.mxu0 %v2216
      %2241 = vmatpush1.bf16.msra.mxu0 %v2215
      %2242 = vmatprep.subr.bf16.mxu0 0
      %2243 = vmatpush2.bf16.msra.mxu0 0
      %2244 = vmatprep.subr.bf16.mxu0 0
      %2245 = vmatpush2.bf16.msra.mxu0 0
      %2246 = vmatprep.subr.bf16.mxu0 0
      %2247 = vmatpush2.bf16.msra.mxu0 0
      %2248 = vmatprep.subr.bf16.mxu0 0
      %2249 = vmatpush2.bf16.msra.mxu0 0
      %2250 = vmatprep.subr.bf16.mxu0 0
      %2251 = vmatpush2.bf16.msra.mxu0 0
      %2252 = vmatprep.subr.bf16.mxu0 0
      %2253 = vmatpush2.bf16.msra.mxu0 0
      %2254 = vmatprep.subr.bf16.mxu0 0
      %2255 = vmatpush2.bf16.msra.mxu0 0
      %2256 = vmatprep.subr.bf16.mxu0 0
      %2257 = vmatpush2.bf16.msra.mxu0 0
      %2258 = vmatprep.mubr.bf16.mxu0 0
      %2259 = vmatmul.mubr.bf16.gmra.mxu0 %v2224
      %v2260 = vpop.f32.mrf.mxu0
      %v2261 = vadd.f32 0.0, %v2260
      %v2262 = vpop.f32.mrf.mxu0
      %v2263 = vadd.f32 0.0, %v2262
      %v2264 = vpop.f32.mrf.mxu0
      %v2265 = vpop.f32.mrf.mxu0
      %2266 = vdwg.mxu0
      %v2267 = vadd.f32 %v2194, %v2261
      %v2268 = vadd.f32 %v2196, %v2263
      %v2269 = vld [vmem:[#allocation2 + $0x4] sm:$0xff]
      %v2270 = vld [vmem:[#allocation2 + $0x14] sm:$0xff]
      %v2271 = vld [vmem:[#allocation2 + $0x24] sm:$0xff]
      %v2272 = vld [vmem:[#allocation2 + $0x34] sm:$0xff]
      %s2273 = scalar_lea.vmem %s5, 12
      %v2274 = vld [vmem:[%s2273] sm:$0xf]
      %v2279 = vunpack.c.l.b16 %v2269
      %v2280 = vunpack.c.h.b16 %v2269
      %v2281 = vunpack.c.l.b16 %v2270
      %v2282 = vunpack.c.h.b16 %v2270
      %v2283 = vunpack.c.l.b16 %v2271
      %v2284 = vunpack.c.h.b16 %v2271
      %v2285 = vunpack.c.l.b16 %v2272
      %v2286 = vunpack.c.h.b16 %v2272
      %v2287 = vpack.c.b16 %v2281, %v2279
      %v2288 = vpack.c.b16 %v2282, %v2280
      %v2289 = vpack.c.b16 %v2285, %v2283
      %v2290 = vpack.c.b16 %v2286, %v2284
      %v2296 = vsel %vm2090, %v2274, 0
      %2298 = vmatprep.subr.bf16.mxu0 0
      %2299 = vmatpush1.bf16.msra.mxu0 0
      %2300 = vmatprep.subr.bf16.mxu0 0
      %2301 = vmatpush1.bf16.msra.mxu0 0
      %2302 = vmatprep.subr.bf16.mxu0 0
      %2303 = vmatpush1.bf16.msra.mxu0 0
      %2304 = vmatprep.subr.bf16.mxu0 0
      %2305 = vmatpush1.bf16.msra.mxu0 0
      %2306 = vmatprep.subr.bf16.mxu0 0
      %2307 = vmatpush1.bf16.msra.mxu0 0
      %2308 = vmatprep.subr.bf16.mxu0 0
      %2309 = vmatpush1.bf16.msra.mxu0 0
      %2310 = vmatprep.subr.bf16.mxu0 %v2290
      %2311 = vmatpush1.bf16.msra.mxu0 %v2289
      %2312 = vmatprep.subr.bf16.mxu0 %v2288
      %2313 = vmatpush1.bf16.msra.mxu0 %v2287
      %2314 = vmatprep.subr.bf16.mxu0 0
      %2315 = vmatpush2.bf16.msra.mxu0 0
      %2316 = vmatprep.subr.bf16.mxu0 0
      %2317 = vmatpush2.bf16.msra.mxu0 0
      %2318 = vmatprep.subr.bf16.mxu0 0
      %2319 = vmatpush2.bf16.msra.mxu0 0
      %2320 = vmatprep.subr.bf16.mxu0 0
      %2321 = vmatpush2.bf16.msra.mxu0 0
      %2322 = vmatprep.subr.bf16.mxu0 0
      %2323 = vmatpush2.bf16.msra.mxu0 0
      %2324 = vmatprep.subr.bf16.mxu0 0
      %2325 = vmatpush2.bf16.msra.mxu0 0
      %2326 = vmatprep.subr.bf16.mxu0 0
      %2327 = vmatpush2.bf16.msra.mxu0 0
      %2328 = vmatprep.subr.bf16.mxu0 0
      %2329 = vmatpush2.bf16.msra.mxu0 0
      %2330 = vmatprep.mubr.bf16.mxu0 0
      %2331 = vmatmul.mubr.bf16.gmra.mxu0 %v2296
      %v2332 = vpop.f32.mrf.mxu0
      %v2333 = vadd.f32 0.0, %v2332
      %v2334 = vpop.f32.mrf.mxu0
      %v2335 = vadd.f32 0.0, %v2334
      %v2336 = vpop.f32.mrf.mxu0
      %v2337 = vpop.f32.mrf.mxu0
      %2338 = vdwg.mxu0
      %v2339 = vadd.f32 %v2267, %v2333
      %v2340 = vadd.f32 %v2268, %v2335
      %v2341 = vld [vmem:[#allocation2 + $0x4] sm:$0xff]
      %v2342 = vld [vmem:[#allocation2 + $0xc] sm:$0xf]
      %v2343 = vld [vmem:[#allocation2 + $0x14] sm:$0xff]
      %v2344 = vld [vmem:[#allocation2 + $0x1c] sm:$0xf]
      %v2345 = vld [vmem:[#allocation2 + $0x24] sm:$0xff]
      %v2346 = vld [vmem:[#allocation2 + $0x2c] sm:$0xf]
      %v2347 = vld [vmem:[#allocation2 + $0x34] sm:$0xff]
      %v2348 = vld [vmem:[#allocation2 + $0x3c] sm:$0xf]
      %s2349 = scalar_lea.vmem %s5, 16
      %v2350 = vld [vmem:[%s2349] sm:$0xf]
      %v2359 = vunpack.c.l.b16 %v2341
      %v2360 = vunpack.c.h.b16 %v2341
      %v2361 = vunpack.c.l.b16 %v2342
      %v2362 = vunpack.c.l.b16 %v2343
      %v2363 = vunpack.c.h.b16 %v2343
      %v2364 = vunpack.c.l.b16 %v2344
      %v2365 = vunpack.c.l.b16 %v2345
      %v2366 = vunpack.c.h.b16 %v2345
      %v2367 = vunpack.c.l.b16 %v2346
      %v2368 = vunpack.c.l.b16 %v2347
      %v2369 = vunpack.c.h.b16 %v2347
      %v2370 = vunpack.c.l.b16 %v2348
      %v2371 = vpack.c.b16 %v2362, %v2359
      %v2372 = vpack.c.b16 %v2363, %v2360
      %v2373 = vpack.c.b16 %v2364, %v2361
      %v2374 = vpack.c.b16 %v2368, %v2365
      %v2375 = vpack.c.b16 %v2369, %v2366
      %v2376 = vpack.c.b16 %v2370, %v2367
      %2377 = vrot.lane.b32.xlu0 %v2371, 127
      %v2378 = vpop.permute.xlu0 %2377
      %2379 = vrot.lane.b32.xlu0 %v2372, 127
      %v2380 = vpop.permute.xlu0 %2379
      %2381 = vrot.lane.b32.xlu0 %v2373, 127
      %v2382 = vpop.permute.xlu0 %2381
      %2383 = vrot.lane.b32.xlu0 %v2374, 127
      %v2384 = vpop.permute.xlu0 %2383
      %2385 = vrot.lane.b32.xlu0 %v2375, 127
      %v2386 = vpop.permute.xlu0 %2385
      %2387 = vrot.lane.b32.xlu0 %v2376, 127
      %v2388 = vpop.permute.xlu0 %2387
      %vm2389 = vcmask 1039360
      %v2390 = vsel %vm2389, %v2378, %v2380
      %v2391 = vsel %vm2389, %v2380, %v2382
      %v2392 = vsel %vm2389, %v2384, %v2386
      %v2393 = vsel %vm2389, %v2386, %v2388
      %v2399 = vsel %vm2090, %v2350, 0
      %2401 = vmatprep.subr.bf16.mxu0 0
      %2402 = vmatpush1.bf16.msra.mxu0 0
      %2403 = vmatprep.subr.bf16.mxu0 0
      %2404 = vmatpush1.bf16.msra.mxu0 0
      %2405 = vmatprep.subr.bf16.mxu0 0
      %2406 = vmatpush1.bf16.msra.mxu0 0
      %2407 = vmatprep.subr.bf16.mxu0 0
      %2408 = vmatpush1.bf16.msra.mxu0 0
      %2409 = vmatprep.subr.bf16.mxu0 0
      %2410 = vmatpush1.bf16.msra.mxu0 0
      %2411 = vmatprep.subr.bf16.mxu0 0
      %2412 = vmatpush1.bf16.msra.mxu0 0
      %2413 = vmatprep.subr.bf16.mxu0 %v2393
      %2414 = vmatpush1.bf16.msra.mxu0 %v2392
      %2415 = vmatprep.subr.bf16.mxu0 %v2391
      %2416 = vmatpush1.bf16.msra.mxu0 %v2390
      %2417 = vmatprep.subr.bf16.mxu0 0
      %2418 = vmatpush2.bf16.msra.mxu0 0
      %2419 = vmatprep.subr.bf16.mxu0 0
      %2420 = vmatpush2.bf16.msra.mxu0 0
      %2421 = vmatprep.subr.bf16.mxu0 0
      %2422 = vmatpush2.bf16.msra.mxu0 0
      %2423 = vmatprep.subr.bf16.mxu0 0
      %2424 = vmatpush2.bf16.msra.mxu0 0
      %2425 = vmatprep.subr.bf16.mxu0 0
      %2426 = vmatpush2.bf16.msra.mxu0 0
      %2427 = vmatprep.subr.bf16.mxu0 0
      %2428 = vmatpush2.bf16.msra.mxu0 0
      %2429 = vmatprep.subr.bf16.mxu0 0
      %2430 = vmatpush2.bf16.msra.mxu0 0
      %2431 = vmatprep.subr.bf16.mxu0 0
      %2432 = vmatpush2.bf16.msra.mxu0 0
      %2433 = vmatprep.mubr.bf16.mxu0 0
      %2434 = vmatmul.mubr.bf16.gmra.mxu0 %v2399
      %v2435 = vpop.f32.mrf.mxu0
      %v2436 = vadd.f32 0.0, %v2435
      %v2437 = vpop.f32.mrf.mxu0
      %v2438 = vadd.f32 0.0, %v2437
      %v2439 = vpop.f32.mrf.mxu0
      %v2440 = vpop.f32.mrf.mxu0
      %2441 = vdwg.mxu0
      %v2442 = vadd.f32 %v2339, %v2436
      %v2443 = vadd.f32 %v2340, %v2438
      %s2444 = scalar_lea.vmem %s5, 20
      %v2445 = vld [vmem:[%s2444] sm:$0xf]
      %2446 = vrot.lane.b32.xlu0 %v2371, 126
      %v2447 = vpop.permute.xlu0 %2446
      %2448 = vrot.lane.b32.xlu0 %v2372, 126
      %v2449 = vpop.permute.xlu0 %2448
      %2450 = vrot.lane.b32.xlu0 %v2373, 126
      %v2451 = vpop.permute.xlu0 %2450
      %2452 = vrot.lane.b32.xlu0 %v2374, 126
      %v2453 = vpop.permute.xlu0 %2452
      %2454 = vrot.lane.b32.xlu0 %v2375, 126
      %v2455 = vpop.permute.xlu0 %2454
      %2456 = vrot.lane.b32.xlu0 %v2376, 126
      %v2457 = vpop.permute.xlu0 %2456
      %vm2458 = vcmask 1031168
      %v2459 = vsel %vm2458, %v2447, %v2449
      %v2460 = vsel %vm2458, %v2449, %v2451
      %v2461 = vsel %vm2458, %v2453, %v2455
      %v2462 = vsel %vm2458, %v2455, %v2457
      %v2468 = vsel %vm2090, %v2445, 0
      %2470 = vmatprep.subr.bf16.mxu0 0
      %2471 = vmatpush1.bf16.msra.mxu0 0
      %2472 = vmatprep.subr.bf16.mxu0 0
      %2473 = vmatpush1.bf16.msra.mxu0 0
      %2474 = vmatprep.subr.bf16.mxu0 0
      %2475 = vmatpush1.bf16.msra.mxu0 0
      %2476 = vmatprep.subr.bf16.mxu0 0
      %2477 = vmatpush1.bf16.msra.mxu0 0
      %2478 = vmatprep.subr.bf16.mxu0 0
      %2479 = vmatpush1.bf16.msra.mxu0 0
      %2480 = vmatprep.subr.bf16.mxu0 0
      %2481 = vmatpush1.bf16.msra.mxu0 0
      %2482 = vmatprep.subr.bf16.mxu0 %v2462
      %2483 = vmatpush1.bf16.msra.mxu0 %v2461
      %2484 = vmatprep.subr.bf16.mxu0 %v2460
      %2485 = vmatpush1.bf16.msra.mxu0 %v2459
      %2486 = vmatprep.subr.bf16.mxu0 0
      %2487 = vmatpush2.bf16.msra.mxu0 0
      %2488 = vmatprep.subr.bf16.mxu0 0
      %2489 = vmatpush2.bf16.msra.mxu0 0
      %2490 = vmatprep.subr.bf16.mxu0 0
      %2491 = vmatpush2.bf16.msra.mxu0 0
      %2492 = vmatprep.subr.bf16.mxu0 0
      %2493 = vmatpush2.bf16.msra.mxu0 0
      %2494 = vmatprep.subr.bf16.mxu0 0
      %2495 = vmatpush2.bf16.msra.mxu0 0
      %2496 = vmatprep.subr.bf16.mxu0 0
      %2497 = vmatpush2.bf16.msra.mxu0 0
      %2498 = vmatprep.subr.bf16.mxu0 0
      %2499 = vmatpush2.bf16.msra.mxu0 0
      %2500 = vmatprep.subr.bf16.mxu0 0
      %2501 = vmatpush2.bf16.msra.mxu0 0
      %2502 = vmatprep.mubr.bf16.mxu0 0
      %2503 = vmatmul.mubr.bf16.gmra.mxu0 %v2468
      %v2504 = vpop.f32.mrf.mxu0
      %v2505 = vadd.f32 0.0, %v2504
      %v2506 = vpop.f32.mrf.mxu0
      %v2507 = vadd.f32 0.0, %v2506
      %v2508 = vpop.f32.mrf.mxu0
      %v2509 = vpop.f32.mrf.mxu0
      %2510 = vdwg.mxu0
      %v2511 = vadd.f32 %v2442, %v2505
      %v2512 = vadd.f32 %v2443, %v2507
      %s2513 = scalar_lea.vmem %s5, 24
      %v2514 = vld [vmem:[%s2513] sm:$0xf]
      %2515 = vrot.lane.b32.xlu0 %v2371, 125
      %v2516 = vpop.permute.xlu0 %2515
      %2517 = vrot.lane.b32.xlu0 %v2372, 125
      %v2518 = vpop.permute.xlu0 %2517
      %2519 = vrot.lane.b32.xlu0 %v2373, 125
      %v2520 = vpop.permute.xlu0 %2519
      %2521 = vrot.lane.b32.xlu0 %v2374, 125
      %v2522 = vpop.permute.xlu0 %2521
      %2523 = vrot.lane.b32.xlu0 %v2375, 125
      %v2524 = vpop.permute.xlu0 %2523
      %2525 = vrot.lane.b32.xlu0 %v2376, 125
      %v2526 = vpop.permute.xlu0 %2525
      %vm2527 = vcmask 1022976
      %v2528 = vsel %vm2527, %v2516, %v2518
      %v2529 = vsel %vm2527, %v2518, %v2520
      %v2530 = vsel %vm2527, %v2522, %v2524
      %v2531 = vsel %vm2527, %v2524, %v2526
      %v2537 = vsel %vm2090, %v2514, 0
      %2539 = vmatprep.subr.bf16.mxu0 0
      %2540 = vmatpush1.bf16.msra.mxu0 0
      %2541 = vmatprep.subr.bf16.mxu0 0
      %2542 = vmatpush1.bf16.msra.mxu0 0
      %2543 = vmatprep.subr.bf16.mxu0 0
      %2544 = vmatpush1.bf16.msra.mxu0 0
      %2545 = vmatprep.subr.bf16.mxu0 0
      %2546 = vmatpush1.bf16.msra.mxu0 0
      %2547 = vmatprep.subr.bf16.mxu0 0
      %2548 = vmatpush1.bf16.msra.mxu0 0
      %2549 = vmatprep.subr.bf16.mxu0 0
      %2550 = vmatpush1.bf16.msra.mxu0 0
      %2551 = vmatprep.subr.bf16.mxu0 %v2531
      %2552 = vmatpush1.bf16.msra.mxu0 %v2530
      %2553 = vmatprep.subr.bf16.mxu0 %v2529
      %2554 = vmatpush1.bf16.msra.mxu0 %v2528
      %2555 = vmatprep.subr.bf16.mxu0 0
      %2556 = vmatpush2.bf16.msra.mxu0 0
      %2557 = vmatprep.subr.bf16.mxu0 0
      %2558 = vmatpush2.bf16.msra.mxu0 0
      %2559 = vmatprep.subr.bf16.mxu0 0
      %2560 = vmatpush2.bf16.msra.mxu0 0
      %2561 = vmatprep.subr.bf16.mxu0 0
      %2562 = vmatpush2.bf16.msra.mxu0 0
      %2563 = vmatprep.subr.bf16.mxu0 0
      %2564 = vmatpush2.bf16.msra.mxu0 0
      %2565 = vmatprep.subr.bf16.mxu0 0
      %2566 = vmatpush2.bf16.msra.mxu0 0
      %2567 = vmatprep.subr.bf16.mxu0 0
      %2568 = vmatpush2.bf16.msra.mxu0 0
      %2569 = vmatprep.subr.bf16.mxu0 0
      %2570 = vmatpush2.bf16.msra.mxu0 0
      %2571 = vmatprep.mubr.bf16.mxu0 0
      %2572 = vmatmul.mubr.bf16.gmra.mxu0 %v2537
      %v2573 = vpop.f32.mrf.mxu0
      %v2574 = vadd.f32 0.0, %v2573
      %v2575 = vpop.f32.mrf.mxu0
      %v2576 = vadd.f32 0.0, %v2575
      %v2577 = vpop.f32.mrf.mxu0
      %v2578 = vpop.f32.mrf.mxu0
      %2579 = vdwg.mxu0
      %v2580 = vadd.f32 %v2511, %v2574
      %v2581 = vadd.f32 %v2512, %v2576
      %v2582 = vld [vmem:[#allocation3] sm:$0x1]
      %2584 = vset.pattern.permute.xlu0 0
      %2585 = vperm.xlu0 %2584, %v2582
      %v2586 = vpop.permute.xlu0 %2585
      %v2588 = vlaneseq
      %v2589 = vshrl.u32 %v2588, 7
      %v2590 = vsub.s32 0, %v2589
      %v2591 = vrot.slane %v2586, %v2590
      %v2592 = vadd.f32 %v2580, %v2591
      %v2593 = vadd.f32 %v2581, %v2591
      %vm2594 = vcmp.ge.f32.partialorder %v2592, 0.0
      %vm2595 = vcmp.ge.f32.partialorder %v2593, 0.0
      %v2596 = vmul.f32 %v2592, 0.1
      %v2597 = vmul.f32 %v2593, 0.1
      %v2598 = vsel %vm2594, %v2592, %v2596
      %v2599 = vsel %vm2595, %v2593, %v2597
      %v2602 = vcombine.low %v2598, %v2599
      %v2604 = vunpack.c.l.s4 1966171168
      %v2605 = vunpack.c.0.s8 %v2604
      %v2606 = vlaneseq
      %v2607 = vshrl.u32 %v2606, 7
      %v2608 = vsub.s32 %v2605, %v2607
      %v2609 = vrot.slane %v2602, %v2608
      %v2611 = vunpack.c.l.s4 1966171168
      %v2612 = vunpack.c.0.s8 %v2611
      %v2613 = vlaneseq
      %v2614 = vshrl.u32 %v2613, 7
      %v2615 = vsub.s32 %v2612, %v2614
      %v2616 = vrot.slane %v2609, %v2615
      %v2618 = vlaneseq
      %vm2619 = vcmp.ge.s32.totalorder %v2618, 0
      %vm2620 = vcmp.lt.s32.totalorder %v2618, 256
      %vm2621 = vmand %vm2619, %vm2620
      %2622 = vst.msk [vmem:[%s275] sm:$0x3] %vm2621, %v2616
      %p2623 = scmp.lt.s32.totalorder %s20, 2
      %s2624 = scalar_select %p2623, %s20, 2
      %s2625 = smul.addr %s2624, 2
      %s2626 = scalar_lea.vmem %s7, %s2625
      // Predicated region
      $region56: #{net_forward.1} parent=47 // pred_check
        %p2627 = pneg %p190
      $region57: #{net_forward.1} parent=47 // pred_check_branch
        %2629 = sbr.rel (%p2627) target = $region59
      $region58: #{net_forward.1} parent=47 // pred_region
        _
      $region59: #{net_forward.1} parent=47 // pred_fallthru
        _
    $region48: #{net_forward.1} parent=5 // pred_fallthru
      _
    %p2630 = scmp.le.s32.totalorder 2, %s15
    // Predicated region
    $region60: #{net_forward.1} parent=5 // pred_check
      %p2631 = pneg %p2630
    $region61: #{net_forward.1} parent=5 // pred_check_branch
      %2633 = sbr.rel (%p2631) target = $region63
    $region62: #{net_forward.1} parent=5 // pred_region
      %s2634 = ssub.s32 %s15, 2
      // Predicated region
      $region64: #{net_forward.1} parent=62 // pred_check
        %p2635 = pneg %p196
      $region65: #{net_forward.1} parent=62 // pred_check_branch
        %2637 = sbr.rel (%p2635) target = $region67
      $region66: #{net_forward.1} parent=62 // pred_region
        %p2638 = scmp.lt.s32.totalorder %s21, 2
        %s2639 = scalar_select %p2638, %s21, 2
        %s2640 = smul.addr %s2639, 2
        %s2641 = scalar_lea.vmem %s7, %s2640
      $region67: #{net_forward.1} parent=62 // pred_fallthru
        _
    $region63: #{net_forward.1} parent=5 // pred_fallthru
      _
  $region6: #{net_forward.1} parent=0 // loop_footer
    %s19 = sadd.s32 1, %s15
  $region7: #{net_forward.1} parent=0 // loop_footer_branch
    %14 = sbr.rel target = $region3
  $region8: #{net_forward.1} parent=0 // loop_exit
    _

</llo_original>
